<compile_context>
chip_gen: v7x
topology: tpu7x:2x2x1
jax: 0.10.0
libtpu: 0.0.40
codegen_flags: <defaults>
</compile_context>

<pallas_src>
import jax
import jax.numpy as jnp
from jax.experimental import pallas as pl
from jax.experimental.pallas import tpu as pltpu


# --------------------------------------------------------------------------
# kernel
# --------------------------------------------------------------------------
def _make_kernel(with_attn, grid_n, block_n):
    stash_scores = with_attn and grid_n > 1

    def kernel(q_ref, c_ref, wm_ref, wq_ref, b_ref, *refs):
        refs = list(refs)
        out_ref = refs.pop(0)
        attn_ref = refs.pop(0) if with_attn else None
        m_sc, l_sc, acc_sc = refs[0], refs[1], refs[2]
        s_sc = refs[3] if stash_scores else None

        k = pl.program_id(1)

        @pl.when(k == 0)
        def _():
            m_sc[...] = jnp.full(m_sc.shape, -jnp.inf, m_sc.dtype)
            l_sc[...] = jnp.zeros(l_sc.shape, l_sc.dtype)
            acc_sc[...] = jnp.zeros(acc_sc.shape, acc_sc.dtype)

        q = q_ref[...]                      # (TB, D)      activation dtype
        c = c_ref[...]                      # (TB, TN, D)  activation dtype

        # scores chunk s[b, n] = sum_d q[b, d] * c[b, n, d]
        # VPU broadcast-multiply in the activation dtype + f32-accumulated
        # lane reduce: no context^T transpose, no M=1 MXU pushes, and no
        # persistent f32 copy of the context chunk (only one f32 product temp
        # is live at a time).
        s = jnp.sum((q[:, None, :] * c).astype(jnp.float32), axis=-1)  # (TB, TN)

        # online (flash-style) softmax state across the streamed N chunks
        m_prev = m_sc[...]
        m_new = jnp.maximum(m_prev, jnp.max(s, axis=-1, keepdims=True))  # (TB, 1)
        alpha = jnp.exp(m_prev - m_new)                                  # (TB, 1)
        p = jnp.exp(s - m_new)                                           # (TB, TN) f32
        l_new = alpha * l_sc[...] + jnp.sum(p, axis=-1, keepdims=True)
        # partial mix: sum_n p[b, n] * c[b, n, d]   (sublane reduce, f32 acc)
        pmix = jnp.sum((p.astype(c.dtype)[:, :, None] * c).astype(jnp.float32),
                       axis=1)                                           # (TB, D)
        acc_new = alpha * acc_sc[...] + pmix
        m_sc[...] = m_new
        l_sc[...] = l_new
        acc_sc[...] = acc_new

        if stash_scores:
            # Raw scores are only (TB, TN) f32 per chunk -> cheap VMEM stash so
            # the attention map can be normalized exactly once the global
            # max / denominator are known (unlike re-streaming the context).
            s_sc[k] = s

        @pl.when(k == pl.num_programs(1) - 1)
        def _():
            # Exact reciprocal kept on purpose: the denominator is only (TB,1)
            # wide, and exactness keeps the returned attention weights tight
            # against an f32 reference.  (approx=True would move this onto the
            # otherwise-idle EUP slot if reduced precision is acceptable.)
            inv_l = pl.reciprocal(l_new, approx=False)                   # (TB, 1)
            mix = acc_new * inv_l                                        # (TB, D) f32

            # tanh(Linear([mix, q])) == tanh(mix @ w_mix + q @ w_q + b)
            # pre-split weights -> two dense (TB, D) @ (D, D) MXU matmuls with
            # f32 accumulation and no lane-axis concat copy.
            lin = (jnp.dot(mix.astype(wm_ref.dtype), wm_ref[...],
                           preferred_element_type=jnp.float32)
                   + jnp.dot(q.astype(wq_ref.dtype), wq_ref[...],
                             preferred_element_type=jnp.float32)
                   + b_ref[...].astype(jnp.float32))
            out_ref[...] = jnp.tanh(lin).astype(out_ref.dtype)

            if with_attn:
                if stash_scores:
                    for j in range(grid_n):          # static unroll (trace time)
                        a_j = jnp.exp(s_sc[j] - m_new) * inv_l
                        attn_ref[:, j * block_n:(j + 1) * block_n] = (
                            a_j.astype(attn_ref.dtype))
                else:
                    attn_ref[...] = (jnp.exp(s - m_new) * inv_l).astype(attn_ref.dtype)

    return kernel


# --------------------------------------------------------------------------
# sizing helpers
# --------------------------------------------------------------------------
def _sublane(itemsize):
    return {4: 8, 2: 16, 1: 32}.get(int(itemsize), 8)


def _round_up(x, m):
    return ((x + m - 1) // m) * m


def _tpu_info():
    """(vmem_capacity_bytes, two_tensorcores_per_chip?) with safe fallbacks."""
    vmem = 64 * 1024 * 1024          # conservative default (v7x per-TC VMEM)
    try:
        info = pltpu.get_tpu_info()
        vmem = int(getattr(info, "vmem_capacity_bytes", vmem))
    except Exception:
        pass
    try:
        kind = jax.devices()[0].device_kind.lower()
        two_tc = "v7" in kind
    except Exception:
        two_tc = vmem <= 64 * 1024 * 1024
    return vmem, two_tc


def _vmem_estimate(block_b, block_n, N, D, itemsize):
    """Conservative per-step VMEM peak (bytes): double-buffered streams, the
    in-kernel f32 broadcast-product temps, accumulator/score scratch and the
    single-buffered resident weights."""
    f32 = 4
    ctx = 2 * block_b * block_n * D * itemsize              # context, 2 buffers
    tmp = 2 * block_b * block_n * D * f32                   # f32 product temps (x2 margin)
    qio = 2 * block_b * D * itemsize                        # query stream
    oio = 2 * block_b * D * itemsize + 2 * block_b * N * itemsize   # out + attn
    scr = block_b * (N + D + 2) * f32                       # s_sc, acc, m, l
    wgt = (2 * D * D + D) * itemsize                        # single-buffered weights
    return ctx + tmp + qio + oio + scr + wgt


def _choose_blocks(B_pad, N, D, itemsize, vmem_bytes, two_tc):
    sub = _sublane(itemsize)
    # Generation-aware working-set budget (~24 MiB on v7x's 64 MiB VMEM,
    # ~48 MiB on v5e/v6e's 128 MiB); the scoped vmem limit is raised to match.
    budget = (3 * vmem_bytes) // 8

    # Tiny problems: a single grid step -- per-step pipeline overhead (~0.35us)
    # and masked partial stores dominate, so splitting (even across v7x's two
    # TensorCores) is pure overhead.
    if (B_pad * N * D * itemsize < (1 << 20)
            and _vmem_estimate(B_pad, N, N, D, itemsize) <= budget):
        return B_pad, N

    tb_cands = [tb for tb in range(sub, B_pad + 1, sub) if B_pad % tb == 0]
    tn_cands = [N] + [bn for bn in range((N // 8) * 8, 7, -8)
                      if N % bn == 0 and bn != N]

    # Keep the batch block at >= ~256 rows where possible (fills the MXU M dim
    # for the final linear, amortizes per-step overhead); stream the context
    # along N to stay inside the budget.
    tb_target = max([tb for tb in tb_cands if tb <= max(256, sub)],
                    default=tb_cands[0])
    block_n = tn_cands[-1]
    for bn in tn_cands:
        if _vmem_estimate(tb_target, bn, N, D, itemsize) <= budget:
            block_n = bn
            break

    # Grow the batch block as far as the budget allows (the context stream is
    # HBM-bandwidth-bound: bigger per-step DMA -> closer to roofline).  On
    # 2-TC chips keep the parallel grid axis even so neither core idles.
    def _grid_ok(tb):
        if not two_tc or B_pad < 2 * sub:
            return True
        return (B_pad // tb) % 2 == 0

    block_b = None
    for tb in tb_cands:
        if _vmem_estimate(tb, block_n, N, D, itemsize) <= budget and _grid_ok(tb):
            block_b = tb
    if block_b is None:
        block_b = tb_cands[0]
    return block_b, block_n


# --------------------------------------------------------------------------
# wrapper
# --------------------------------------------------------------------------
def prepare_attention_weights(weight, bias):
    """Hoist the nn.Linear weight split/transpose out of the per-call (decode
    loop) path: call once, reuse the tuple via attention_1(..., params=...)."""
    D = weight.shape[0]
    assert weight.shape == (D, 2 * D) and bias.shape == (D,)
    return weight[:, :D].T, weight[:, D:].T, bias.reshape(1, D)


def attention_1(output, context, weight=None, bias=None, *, params=None,
                block_b=None, block_n=None, return_attn=True):
    """Pallas port of Attention_1.forward.

    output : (B, 1, D) decoder query,  context: (B, N, D) encoder states
    weight : (D, 2*D)  nn.Linear(2*D, D).weight (PyTorch layout), bias: (D,)
    Returns (out (B,1,D), attn (B,1,N)) or just out if return_attn=False.
    """
    B, one, D = output.shape
    Bc, N, Dc = context.shape
    assert one == 1 and Bc == B and Dc == D

    if params is None:
        assert weight is not None and bias is not None
        params = prepare_attention_weights(weight, bias)
    w_mix, w_q, bias2 = params
    assert w_mix.shape == (D, D) and w_q.shape == (D, D) and bias2.shape == (1, D)

    itemsize = jnp.dtype(output.dtype).itemsize
    sub = _sublane(itemsize)
    vmem_cap, two_tc = _tpu_info()

    # Pad B to the sublane packing so batch blocks load/store lane/sublane
    # dense (no vst.msk partial stores); padded rows are sliced off below.
    B_pad = _round_up(B, sub)
    if B_pad != B:
        pad = B_pad - B
        output = jnp.pad(output, ((0, pad), (0, 0), (0, 0)))
        context = jnp.pad(context, ((0, pad), (0, 0), (0, 0)))

    if block_b is None or block_n is None:
        auto_b, auto_n = _choose_blocks(B_pad, N, D, itemsize, vmem_cap, two_tc)
        if block_b is None:
            block_b = auto_b
        if block_n is None:
            block_n = auto_n
    assert B_pad % block_b == 0 and N % block_n == 0
    grid_b, grid_n = B_pad // block_b, N // block_n

    est = _vmem_estimate(block_b, block_n, N, D, itemsize)
    # Clamp the scoped limit to 75% of this chip's physical VMEM (<=48 MiB on
    # v7x, <=96 MiB on v5e/v6e) while covering the conservative estimate.
    vmem_limit = int(min(max(2 * est, 32 * 1024 * 1024), (3 * vmem_cap) // 4))

    kernel = _make_kernel(return_attn, grid_n, block_n)
    stash_scores = return_attn and grid_n > 1

    def build(single_buffer_weights):
        # Grid-resident operands (constant index_map) gain nothing from double
        # buffering; single-buffer them to free VMEM for a bigger context block.
        res_kw = ({"pipeline_mode": pl.Buffered(1)}
                  if single_buffer_weights else {})
        in_specs = [
            pl.BlockSpec((block_b, None, D), lambda b, k: (b, 0, 0)),       # query
            pl.BlockSpec((block_b, block_n, D), lambda b, k: (b, k, 0)),    # context
            pl.BlockSpec((D, D), lambda b, k: (0, 0), **res_kw),            # w_mix
            pl.BlockSpec((D, D), lambda b, k: (0, 0), **res_kw),            # w_q
            pl.BlockSpec((1, D), lambda b, k: (0, 0), **res_kw),            # bias
        ]
        out_spec = pl.BlockSpec((block_b, None, D), lambda b, k: (b, 0, 0))
        out_shape = jax.ShapeDtypeStruct((B_pad, 1, D), output.dtype)
        if return_attn:
            # NOTE: for N < 128 (or N % 128 != 0) the attn writeback uses
            # masked partial stores; pass return_attn=False to skip it.
            out_specs = (out_spec,
                         pl.BlockSpec((block_b, None, N), lambda b, k: (b, 0, 0)))
            out_shapes = (out_shape,
                          jax.ShapeDtypeStruct((B_pad, 1, N), output.dtype))
        else:
            out_specs, out_shapes = out_spec, out_shape

        scratch = [pltpu.VMEM((block_b, 1), jnp.float32),   # running max
                   pltpu.VMEM((block_b, 1), jnp.float32),   # running denom
                   pltpu.VMEM((block_b, D), jnp.float32)]   # running mix acc
        if stash_scores:
            scratch.append(pltpu.VMEM((grid_n, block_b, block_n), jnp.float32))

        grid_spec = pltpu.PrefetchScalarGridSpec(
            num_scalar_prefetch=0,
            grid=(grid_b, grid_n),
            in_specs=in_specs,
            out_specs=out_specs,
            scratch_shapes=scratch)

        return pl.pallas_call(
            kernel,
            out_shape=out_shapes,
            grid_spec=grid_spec,
            compiler_params=pltpu.CompilerParams(
                dimension_semantics=("parallel", "arbitrary"),
                vmem_limit_bytes=vmem_limit))

    args = (output, context, w_mix, w_q, bias2)
    try:
        results = build(True)(*args)
    except Exception:
        # pl.Buffered(1) single-buffering isn't supported by every jax build;
        # fall back to default (double) buffering of the resident weights.
        results = build(False)(*args)

    if return_attn:
        out, attn = results
        return out[:B], attn[:B]
    return results[:B]

    # TODO(synk): optional boolean mask (set_mask / masked_fill_(-inf)) is not
    # wired in; it would be an extra (B, 1, N) bool input applied as
    # jnp.where(mask_chunk, -inf, s) before the running max (guarding
    # all-masked rows).


# --------------------------------------------------------------------------
# pure-JAX reference
# --------------------------------------------------------------------------
def reference(output, context, weight, bias):
    s = jnp.einsum('bqd,bnd->bqn', output, context)
    attn = jax.nn.softmax(s, axis=-1)
    mix = jnp.einsum('bqn,bnd->bqd', attn, context)
    combined = jnp.concatenate([mix, output], axis=-1)
    out = jnp.tanh(combined @ weight.T + bias)
    return out, attn


if __name__ == "__main__":
    key = jax.random.PRNGKey(0)
    k1, k2, k3, k4 = jax.random.split(key, 4)

    # --- small shapes consistent with the module ---------------------------
    B, N, D = 8, 8, 32
    output = jax.random.normal(k1, (B, 1, D), dtype=jnp.float32)
    context = jax.random.normal(k2, (B, N, D), dtype=jnp.float32)
    bound = 1.0 / jnp.sqrt(2.0 * D)
    weight = jax.random.uniform(k3, (D, 2 * D), minval=-bound, maxval=bound,
                                dtype=jnp.float32)
    bias = jax.random.uniform(k4, (D,), minval=-bound, maxval=bound,
                              dtype=jnp.float32)

    out, attn = attention_1(output, context, weight, bias)
    out = jax.block_until_ready(out)
    attn = jax.block_until_ready(attn)

    ref_out, ref_attn = reference(output, context, weight, bias)
    assert out.shape == (B, 1, D) and attn.shape == (B, 1, N)
    assert jnp.allclose(out, ref_out, atol=1e-5, rtol=1e-5), \
        float(jnp.max(jnp.abs(out - ref_out)))
    assert jnp.allclose(attn, ref_attn, atol=1e-5, rtol=1e-5), \
        float(jnp.max(jnp.abs(attn - ref_attn)))

    # --- attn-free fast path (no second output writeback) ------------------
    out_only = jax.block_until_ready(
        attention_1(output, context, weight, bias, return_attn=False))
    assert jnp.allclose(out_only, ref_out, atol=1e-5, rtol=1e-5)

    # --- exercise batch padding + the streamed (online-softmax) N axis -----
    B2, N2, D2 = 6, 16, 128
    o2 = jax.random.normal(k1, (B2, 1, D2), dtype=jnp.float32)
    c2 = jax.random.normal(k2, (B2, N2, D2), dtype=jnp.float32)
    w2 = jax.random.uniform(k3, (D2, 2 * D2), minval=-0.1, maxval=0.1,
                            dtype=jnp.float32)
    b2 = jax.random.uniform(k4, (D2,), minval=-0.1, maxval=0.1,
                            dtype=jnp.float32)
    out2, attn2 = attention_1(o2, c2, w2, b2, block_n=8)
    out2 = jax.block_until_ready(out2)
    ref_out2, ref_attn2 = reference(o2, c2, w2, b2)
    assert out2.shape == (B2, 1, D2) and attn2.shape == (B2, 1, N2)
    assert jnp.allclose(out2, ref_out2, atol=1e-5, rtol=1e-5), \
        float(jnp.max(jnp.abs(out2 - ref_out2)))
    assert jnp.allclose(attn2, ref_attn2, atol=1e-5, rtol=1e-5), \
        float(jnp.max(jnp.abs(attn2 - ref_attn2)))

    print("KERNEL_OK")
</pallas_src>

<mosaic_0001>
module attributes {stable_mosaic.version = 11 : i64} {
  func.func @kernel(%arg0: i32, %arg1: i32, %arg2: memref<8x1x32xf32, #tpu.memory_space<vmem>>, %arg3: memref<8x8x32xf32, #tpu.memory_space<vmem>>, %arg4: memref<32x32xf32, #tpu.memory_space<vmem>>, %arg5: memref<32x32xf32, #tpu.memory_space<vmem>>, %arg6: memref<1x32xf32, #tpu.memory_space<vmem>>, %arg7: memref<8x1x32xf32, #tpu.memory_space<vmem>>, %arg8: memref<8x1x8xf32, #tpu.memory_space<vmem>>, %arg9: memref<8x1xf32, #tpu.memory_space<vmem>>, %arg10: memref<8x1xf32, #tpu.memory_space<vmem>>, %arg11: memref<8x32xf32, #tpu.memory_space<vmem>>) attributes {dimension_semantics = [#tpu.dimension_semantics<parallel>, #tpu.dimension_semantics<arbitrary>], iteration_bounds = array<i64: 1, 1>, scalar_prefetch = 0 : i64, scratch_operands = 3 : i64, tpu.core_type = #tpu.core_type<tc>, window_params = [{transform_indices = @transform_0, window_bounds = array<i64: 8, 1, 32>}, {transform_indices = @transform_1, window_bounds = array<i64: 8, 8, 32>}, {pipeline_mode = #tpu.pipeline_mode<synchronous>, transform_indices = @transform_2, window_bounds = array<i64: 32, 32>}, {pipeline_mode = #tpu.pipeline_mode<synchronous>, transform_indices = @transform_3, window_bounds = array<i64: 32, 32>}, {pipeline_mode = #tpu.pipeline_mode<synchronous>, transform_indices = @transform_4, window_bounds = array<i64: 1, 32>}, {transform_indices = @transform_5, window_bounds = array<i64: 8, 1, 32>}, {transform_indices = @transform_6, window_bounds = array<i64: 8, 1, 8>}]} {
    %c0_i32 = arith.constant 0 : i32
    %0 = arith.cmpi eq, %arg1, %c0_i32 : i32
    %1 = arith.extui %0 : i1 to i32
    %c0_i32_0 = arith.constant 0 : i32
    %2 = arith.cmpi ne, %1, %c0_i32_0 : i32
    scf.if %2 {
      %cst_23 = arith.constant 0xFF800000 : f32
      %38 = vector.broadcast %cst_23 : f32 to vector<8x1xf32>
      %c0_24 = arith.constant 0 : index
      %c0_25 = arith.constant 0 : index
      %39 = vector.load %arg9[%c0_24, %c0_25] : memref<8x1xf32, #tpu.memory_space<vmem>>, vector<8x1xf32>
      tpu.vector_store %arg9[%c0_24, %c0_25], %38 {strides = array<i32>} : memref<8x1xf32, #tpu.memory_space<vmem>>, vector<8x1xf32>,
      %cst_26 = arith.constant 0.000000e+00 : f32
      %40 = vector.broadcast %cst_26 : f32 to vector<8x1xf32>
      %c0_27 = arith.constant 0 : index
      %c0_28 = arith.constant 0 : index
      %41 = vector.load %arg10[%c0_27, %c0_28] : memref<8x1xf32, #tpu.memory_space<vmem>>, vector<8x1xf32>
      tpu.vector_store %arg10[%c0_27, %c0_28], %40 {strides = array<i32>} : memref<8x1xf32, #tpu.memory_space<vmem>>, vector<8x1xf32>,
      %cst_29 = arith.constant 0.000000e+00 : f32
      %42 = vector.broadcast %cst_29 : f32 to vector<8x32xf32>
      %c0_30 = arith.constant 0 : index
      %c0_31 = arith.constant 0 : index
      %43 = vector.load %arg11[%c0_30, %c0_31] : memref<8x32xf32, #tpu.memory_space<vmem>>, vector<8x32xf32>
      tpu.vector_store %arg11[%c0_30, %c0_31], %42 {strides = array<i32>} : memref<8x32xf32, #tpu.memory_space<vmem>>, vector<8x32xf32>,
    } else {
    }
    %c0 = arith.constant 0 : index
    %c0_1 = arith.constant 0 : index
    %c0_2 = arith.constant 0 : index
    %3 = vector.load %arg2[%c0, %c0_1, %c0_2] : memref<8x1x32xf32, #tpu.memory_space<vmem>>, vector<8x1x32xf32>
    %4 = vector.shape_cast %3 : vector<8x1x32xf32> to vector<8x32xf32>
    %c0_3 = arith.constant 0 : index
    %c0_4 = arith.constant 0 : index
    %c0_5 = arith.constant 0 : index
    %5 = vector.load %arg3[%c0_3, %c0_4, %c0_5] : memref<8x8x32xf32, #tpu.memory_space<vmem>>, vector<8x8x32xf32>
    %6 = vector.shape_cast %4 : vector<8x32xf32> to vector<8x1x32xf32>
    %7 = vector.broadcast %6 : vector<8x1x32xf32> to vector<8x8x32xf32>
    %8 = arith.mulf %7, %5 : vector<8x8x32xf32>
    %cst = arith.constant dense<0.000000e+00> : vector<8x8xf32>
    %9 = vector.multi_reduction <add>, %8, %cst [2] : vector<8x8x32xf32> to vector<8x8xf32>
    %c0_6 = arith.constant 0 : index
    %c0_7 = arith.constant 0 : index
    %10 = vector.load %arg9[%c0_6, %c0_7] : memref<8x1xf32, #tpu.memory_space<vmem>>, vector<8x1xf32>
    %cst_8 = arith.constant dense<0xFF800000> : vector<8xf32>
    %11 = vector.multi_reduction <maximumf>, %9, %cst_8 [1] : vector<8x8xf32> to vector<8xf32>
    %12 = vector.shape_cast %11 : vector<8xf32> to vector<8x1xf32>
    %13 = arith.maximumf %10, %12 : vector<8x1xf32>
    %14 = arith.subf %10, %13 : vector<8x1xf32>
    %15 = math.exp %14 : vector<8x1xf32>
    %16 = vector.broadcast %13 : vector<8x1xf32> to vector<8x8xf32>
    %17 = arith.subf %9, %16 : vector<8x8xf32>
    %18 = math.exp %17 : vector<8x8xf32>
    %c0_9 = arith.constant 0 : index
    %c0_10 = arith.constant 0 : index
    %19 = vector.load %arg10[%c0_9, %c0_10] : memref<8x1xf32, #tpu.memory_space<vmem>>, vector<8x1xf32>
    %20 = arith.mulf %15, %19 : vector<8x1xf32>
    %cst_11 = arith.constant dense<0.000000e+00> : vector<8xf32>
    %21 = vector.multi_reduction <add>, %18, %cst_11 [1] : vector<8x8xf32> to vector<8xf32>
    %22 = vector.shape_cast %21 : vector<8xf32> to vector<8x1xf32>
    %23 = arith.addf %20, %22 : vector<8x1xf32>
    %24 = vector.shape_cast %18 : vector<8x8xf32> to vector<8x8x1xf32>
    %25 = vector.broadcast %24 : vector<8x8x1xf32> to vector<8x8x32xf32>
    %26 = arith.mulf %25, %5 : vector<8x8x32xf32>
    %cst_12 = arith.constant dense<0.000000e+00> : vector<8x32xf32>
    %27 = vector.multi_reduction <add>, %26, %cst_12 [1] : vector<8x8x32xf32> to vector<8x32xf32>
    %c0_13 = arith.constant 0 : index
    %c0_14 = arith.constant 0 : index
    %28 = vector.load %arg11[%c0_13, %c0_14] : memref<8x32xf32, #tpu.memory_space<vmem>>, vector<8x32xf32>
    %29 = vector.broadcast %15 : vector<8x1xf32> to vector<8x32xf32>
    %30 = arith.mulf %29, %28 : vector<8x32xf32>
    %31 = arith.addf %30, %27 : vector<8x32xf32>
    %c0_15 = arith.constant 0 : index
    %c0_16 = arith.constant 0 : index
    %32 = vector.load %arg9[%c0_15, %c0_16] : memref<8x1xf32, #tpu.memory_space<vmem>>, vector<8x1xf32>
    tpu.vector_store %arg9[%c0_15, %c0_16], %13 {strides = array<i32>} : memref<8x1xf32, #tpu.memory_space<vmem>>, vector<8x1xf32>,
    %c0_17 = arith.constant 0 : index
    %c0_18 = arith.constant 0 : index
    %33 = vector.load %arg10[%c0_17, %c0_18] : memref<8x1xf32, #tpu.memory_space<vmem>>, vector<8x1xf32>
    tpu.vector_store %arg10[%c0_17, %c0_18], %23 {strides = array<i32>} : memref<8x1xf32, #tpu.memory_space<vmem>>, vector<8x1xf32>,
    %c0_19 = arith.constant 0 : index
    %c0_20 = arith.constant 0 : index
    %34 = vector.load %arg11[%c0_19, %c0_20] : memref<8x32xf32, #tpu.memory_space<vmem>>, vector<8x32xf32>
    tpu.vector_store %arg11[%c0_19, %c0_20], %31 {strides = array<i32>} : memref<8x32xf32, #tpu.memory_space<vmem>>, vector<8x32xf32>,
    %c0_i32_21 = arith.constant 0 : i32
    %35 = arith.cmpi eq, %arg1, %c0_i32_21 : i32
    %36 = arith.extui %35 : i1 to i32
    %c0_i32_22 = arith.constant 0 : i32
    %37 = arith.cmpi ne, %36, %c0_i32_22 : i32
    scf.if %37 {
      %38 = tpu.reciprocal %23 : vector<8x1xf32> -> vector<8x1xf32>
      %39 = vector.broadcast %38 : vector<8x1xf32> to vector<8x32xf32>
      %40 = arith.mulf %31, %39 : vector<8x32xf32>
      %c0_23 = arith.constant 0 : index
      %c0_24 = arith.constant 0 : index
      %41 = vector.load %arg4[%c0_23, %c0_24] : memref<32x32xf32, #tpu.memory_space<vmem>>, vector<32x32xf32>
      %cst_25 = arith.constant dense<0.000000e+00> : vector<8x32xf32>
      %42 = tpu.matmul %40, %41, %cst_25 {dimension_numbers = #tpu.dot_dimension_numbers<[1], [0], [0], [1], [0, 0, 1, 1], [], []>} : vector<8x32xf32>, vector<32x32xf32>, vector<8x32xf32> -> vector<8x32xf32>
      %c0_26 = arith.constant 0 : index
      %c0_27 = arith.constant 0 : index
      %43 = vector.load %arg5[%c0_26, %c0_27] : memref<32x32xf32, #tpu.memory_space<vmem>>, vector<32x32xf32>
      %cst_28 = arith.constant dense<0.000000e+00> : vector<8x32xf32>
      %44 = tpu.matmul %4, %43, %cst_28 {dimension_numbers = #tpu.dot_dimension_numbers<[1], [0], [0], [1], [0, 0, 1, 1], [], []>} : vector<8x32xf32>, vector<32x32xf32>, vector<8x32xf32> -> vector<8x32xf32>
      %45 = arith.addf %42, %44 : vector<8x32xf32>
      %c0_29 = arith.constant 0 : index
      %c0_30 = arith.constant 0 : index
      %46 = vector.load %arg6[%c0_29, %c0_30] : memref<1x32xf32, #tpu.memory_space<vmem>>, vector<1x32xf32>
      %47 = vector.broadcast %46 : vector<1x32xf32> to vector<8x32xf32>
      %48 = arith.addf %45, %47 : vector<8x32xf32>
      %49 = math.tanh %48 : vector<8x32xf32>
      %c0_31 = arith.constant 0 : index
      %c0_32 = arith.constant 0 : index
      %c0_33 = arith.constant 0 : index
      %50 = vector.load %arg7[%c0_31, %c0_32, %c0_33] : memref<8x1x32xf32, #tpu.memory_space<vmem>>, vector<8x1x32xf32>
      %51 = vector.shape_cast %50 : vector<8x1x32xf32> to vector<8x32xf32>
      %52 = vector.shape_cast %49 : vector<8x32xf32> to vector<8x1x32xf32>
      tpu.vector_store %arg7[%c0_31, %c0_32, %c0_33], %52 {strides = array<i32>} : memref<8x1x32xf32, #tpu.memory_space<vmem>>, vector<8x1x32xf32>,
      %53 = vector.broadcast %13 : vector<8x1xf32> to vector<8x8xf32>
      %54 = arith.subf %9, %53 : vector<8x8xf32>
      %55 = math.exp %54 : vector<8x8xf32>
      %56 = vector.broadcast %38 : vector<8x1xf32> to vector<8x8xf32>
      %57 = arith.mulf %55, %56 : vector<8x8xf32>
      %c0_34 = arith.constant 0 : index
      %c0_35 = arith.constant 0 : index
      %c0_36 = arith.constant 0 : index
      %58 = vector.load %arg8[%c0_34, %c0_35, %c0_36] : memref<8x1x8xf32, #tpu.memory_space<vmem>>, vector<8x1x8xf32>
      %59 = vector.shape_cast %58 : vector<8x1x8xf32> to vector<8x8xf32>
      %60 = vector.shape_cast %57 : vector<8x8xf32> to vector<8x1x8xf32>
      tpu.vector_store %arg8[%c0_34, %c0_35, %c0_36], %60 {strides = array<i32>} : memref<8x1x8xf32, #tpu.memory_space<vmem>>, vector<8x1x8xf32>,
    } else {
    }
    return
  }
  func.func @transform_0(%arg0: i32, %arg1: i32) -> (i32, i32, i32) {
    %c0_i32 = arith.constant 0 : i32
    %c0_i32_0 = arith.constant 0 : i32
    %c0_i32_1 = arith.constant 0 : i32
    return %arg0, %c0_i32, %c0_i32_0 : i32, i32, i32
  }
  func.func @transform_1(%arg0: i32, %arg1: i32) -> (i32, i32, i32) {
    %c0_i32 = arith.constant 0 : i32
    %c0_i32_0 = arith.constant 0 : i32
    return %arg0, %arg1, %c0_i32 : i32, i32, i32
  }
  func.func @transform_2(%arg0: i32, %arg1: i32) -> (i32, i32) {
    %c0_i32 = arith.constant 0 : i32
    %c0_i32_0 = arith.constant 0 : i32
    %c0_i32_1 = arith.constant 0 : i32
    return %c0_i32, %c0_i32_0 : i32, i32
  }
  func.func @transform_3(%arg0: i32, %arg1: i32) -> (i32, i32) {
    %c0_i32 = arith.constant 0 : i32
    %c0_i32_0 = arith.constant 0 : i32
    %c0_i32_1 = arith.constant 0 : i32
    return %c0_i32, %c0_i32_0 : i32, i32
  }
  func.func @transform_4(%arg0: i32, %arg1: i32) -> (i32, i32) {
    %c0_i32 = arith.constant 0 : i32
    %c0_i32_0 = arith.constant 0 : i32
    %c0_i32_1 = arith.constant 0 : i32
    return %c0_i32, %c0_i32_0 : i32, i32
  }
  func.func @transform_5(%arg0: i32, %arg1: i32) -> (i32, i32, i32) {
    %c0_i32 = arith.constant 0 : i32
    %c0_i32_0 = arith.constant 0 : i32
    %c0_i32_1 = arith.constant 0 : i32
    return %arg0, %c0_i32, %c0_i32_0 : i32, i32, i32
  }
  func.func @transform_6(%arg0: i32, %arg1: i32) -> (i32, i32, i32) {
    %c0_i32 = arith.constant 0 : i32
    %c0_i32_0 = arith.constant 0 : i32
    %c0_i32_1 = arith.constant 0 : i32
    return %arg0, %c0_i32, %c0_i32_0 : i32, i32, i32
  }
}

module attributes {stable_mosaic.version = 11 : i64} {
  func.func @kernel(%arg0: i32, %arg1: i32, %arg2: memref<8x1x32xf32, #tpu.memory_space<vmem>>, %arg3: memref<8x8x32xf32, #tpu.memory_space<vmem>>, %arg4: memref<32x32xf32, #tpu.memory_space<vmem>>, %arg5: memref<32x32xf32, #tpu.memory_space<vmem>>, %arg6: memref<1x32xf32, #tpu.memory_space<vmem>>, %arg7: memref<8x1x32xf32, #tpu.memory_space<vmem>>, %arg8: memref<8x1x8xf32, #tpu.memory_space<vmem>>, %arg9: memref<8x1xf32, #tpu.memory_space<vmem>>, %arg10: memref<8x1xf32, #tpu.memory_space<vmem>>, %arg11: memref<8x32xf32, #tpu.memory_space<vmem>>) attributes {dimension_semantics = [#tpu.dimension_semantics<parallel>, #tpu.dimension_semantics<arbitrary>], iteration_bounds = array<i64: 1, 1>, scalar_prefetch = 0 : i64, scratch_operands = 3 : i64, tpu.core_type = #tpu.core_type<tc>, window_params = [{transform_indices = @transform_0, window_bounds = array<i64: 8, 1, 32>}, {transform_indices = @transform_1, window_bounds = array<i64: 8, 8, 32>}, {pipeline_mode = #tpu.pipeline_mode<synchronous>, transform_indices = @transform_2, window_bounds = array<i64: 32, 32>}, {pipeline_mode = #tpu.pipeline_mode<synchronous>, transform_indices = @transform_3, window_bounds = array<i64: 32, 32>}, {pipeline_mode = #tpu.pipeline_mode<synchronous>, transform_indices = @transform_4, window_bounds = array<i64: 1, 32>}, {transform_indices = @transform_5, window_bounds = array<i64: 8, 1, 32>}, {transform_indices = @transform_6, window_bounds = array<i64: 8, 1, 8>}]} {
    %c0_i32 = arith.constant 0 : i32
    %0 = arith.cmpi eq, %arg1, %c0_i32 : i32
    %1 = arith.extui %0 : i1 to i32
    %c0_i32_0 = arith.constant 0 : i32
    %2 = arith.cmpi ne, %1, %c0_i32_0 : i32
    scf.if %2 {
      %cst_23 = arith.constant 0xFF800000 : f32
      %38 = vector.broadcast %cst_23 : f32 to vector<8x1xf32>
      %c0_24 = arith.constant 0 : index
      %c0_25 = arith.constant 0 : index
      %39 = vector.load %arg9[%c0_24, %c0_25] : memref<8x1xf32, #tpu.memory_space<vmem>>, vector<8x1xf32>
      tpu.vector_store %arg9[%c0_24, %c0_25], %38 {strides = array<i32>} : memref<8x1xf32, #tpu.memory_space<vmem>>, vector<8x1xf32>,
      %cst_26 = arith.constant 0.000000e+00 : f32
      %40 = vector.broadcast %cst_26 : f32 to vector<8x1xf32>
      %c0_27 = arith.constant 0 : index
      %c0_28 = arith.constant 0 : index
      %41 = vector.load %arg10[%c0_27, %c0_28] : memref<8x1xf32, #tpu.memory_space<vmem>>, vector<8x1xf32>
      tpu.vector_store %arg10[%c0_27, %c0_28], %40 {strides = array<i32>} : memref<8x1xf32, #tpu.memory_space<vmem>>, vector<8x1xf32>,
      %cst_29 = arith.constant 0.000000e+00 : f32
      %42 = vector.broadcast %cst_29 : f32 to vector<8x32xf32>
      %c0_30 = arith.constant 0 : index
      %c0_31 = arith.constant 0 : index
      %43 = vector.load %arg11[%c0_30, %c0_31] : memref<8x32xf32, #tpu.memory_space<vmem>>, vector<8x32xf32>
      tpu.vector_store %arg11[%c0_30, %c0_31], %42 {strides = array<i32>} : memref<8x32xf32, #tpu.memory_space<vmem>>, vector<8x32xf32>,
    } else {
    }
    %c0 = arith.constant 0 : index
    %c0_1 = arith.constant 0 : index
    %c0_2 = arith.constant 0 : index
    %3 = vector.load %arg2[%c0, %c0_1, %c0_2] : memref<8x1x32xf32, #tpu.memory_space<vmem>>, vector<8x1x32xf32>
    %4 = vector.shape_cast %3 : vector<8x1x32xf32> to vector<8x32xf32>
    %c0_3 = arith.constant 0 : index
    %c0_4 = arith.constant 0 : index
    %c0_5 = arith.constant 0 : index
    %5 = vector.load %arg3[%c0_3, %c0_4, %c0_5] : memref<8x8x32xf32, #tpu.memory_space<vmem>>, vector<8x8x32xf32>
    %6 = vector.shape_cast %4 : vector<8x32xf32> to vector<8x1x32xf32>
    %7 = vector.broadcast %6 : vector<8x1x32xf32> to vector<8x8x32xf32>
    %8 = arith.mulf %7, %5 : vector<8x8x32xf32>
    %cst = arith.constant dense<0.000000e+00> : vector<8x8xf32>
    %9 = vector.multi_reduction <add>, %8, %cst [2] : vector<8x8x32xf32> to vector<8x8xf32>
    %c0_6 = arith.constant 0 : index
    %c0_7 = arith.constant 0 : index
    %10 = vector.load %arg9[%c0_6, %c0_7] : memref<8x1xf32, #tpu.memory_space<vmem>>, vector<8x1xf32>
    %cst_8 = arith.constant dense<0xFF800000> : vector<8xf32>
    %11 = vector.multi_reduction <maximumf>, %9, %cst_8 [1] : vector<8x8xf32> to vector<8xf32>
    %12 = vector.shape_cast %11 : vector<8xf32> to vector<8x1xf32>
    %13 = arith.maximumf %10, %12 : vector<8x1xf32>
    %14 = arith.subf %10, %13 : vector<8x1xf32>
    %15 = math.exp %14 : vector<8x1xf32>
    %16 = vector.broadcast %13 : vector<8x1xf32> to vector<8x8xf32>
    %17 = arith.subf %9, %16 : vector<8x8xf32>
    %18 = math.exp %17 : vector<8x8xf32>
    %c0_9 = arith.constant 0 : index
    %c0_10 = arith.constant 0 : index
    %19 = vector.load %arg10[%c0_9, %c0_10] : memref<8x1xf32, #tpu.memory_space<vmem>>, vector<8x1xf32>
    %20 = arith.mulf %15, %19 : vector<8x1xf32>
    %cst_11 = arith.constant dense<0.000000e+00> : vector<8xf32>
    %21 = vector.multi_reduction <add>, %18, %cst_11 [1] : vector<8x8xf32> to vector<8xf32>
    %22 = vector.shape_cast %21 : vector<8xf32> to vector<8x1xf32>
    %23 = arith.addf %20, %22 : vector<8x1xf32>
    %24 = vector.shape_cast %18 : vector<8x8xf32> to vector<8x8x1xf32>
    %25 = vector.broadcast %24 : vector<8x8x1xf32> to vector<8x8x32xf32>
    %26 = arith.mulf %25, %5 : vector<8x8x32xf32>
    %cst_12 = arith.constant dense<0.000000e+00> : vector<8x32xf32>
    %27 = vector.multi_reduction <add>, %26, %cst_12 [1] : vector<8x8x32xf32> to vector<8x32xf32>
    %c0_13 = arith.constant 0 : index
    %c0_14 = arith.constant 0 : index
    %28 = vector.load %arg11[%c0_13, %c0_14] : memref<8x32xf32, #tpu.memory_space<vmem>>, vector<8x32xf32>
    %29 = vector.broadcast %15 : vector<8x1xf32> to vector<8x32xf32>
    %30 = arith.mulf %29, %28 : vector<8x32xf32>
    %31 = arith.addf %30, %27 : vector<8x32xf32>
    %c0_15 = arith.constant 0 : index
    %c0_16 = arith.constant 0 : index
    %32 = vector.load %arg9[%c0_15, %c0_16] : memref<8x1xf32, #tpu.memory_space<vmem>>, vector<8x1xf32>
    tpu.vector_store %arg9[%c0_15, %c0_16], %13 {strides = array<i32>} : memref<8x1xf32, #tpu.memory_space<vmem>>, vector<8x1xf32>,
    %c0_17 = arith.constant 0 : index
    %c0_18 = arith.constant 0 : index
    %33 = vector.load %arg10[%c0_17, %c0_18] : memref<8x1xf32, #tpu.memory_space<vmem>>, vector<8x1xf32>
    tpu.vector_store %arg10[%c0_17, %c0_18], %23 {strides = array<i32>} : memref<8x1xf32, #tpu.memory_space<vmem>>, vector<8x1xf32>,
    %c0_19 = arith.constant 0 : index
    %c0_20 = arith.constant 0 : index
    %34 = vector.load %arg11[%c0_19, %c0_20] : memref<8x32xf32, #tpu.memory_space<vmem>>, vector<8x32xf32>
    tpu.vector_store %arg11[%c0_19, %c0_20], %31 {strides = array<i32>} : memref<8x32xf32, #tpu.memory_space<vmem>>, vector<8x32xf32>,
    %c0_i32_21 = arith.constant 0 : i32
    %35 = arith.cmpi eq, %arg1, %c0_i32_21 : i32
    %36 = arith.extui %35 : i1 to i32
    %c0_i32_22 = arith.constant 0 : i32
    %37 = arith.cmpi ne, %36, %c0_i32_22 : i32
    scf.if %37 {
      %38 = tpu.reciprocal %23 : vector<8x1xf32> -> vector<8x1xf32>
      %39 = vector.broadcast %38 : vector<8x1xf32> to vector<8x32xf32>
      %40 = arith.mulf %31, %39 : vector<8x32xf32>
      %c0_23 = arith.constant 0 : index
      %c0_24 = arith.constant 0 : index
      %41 = vector.load %arg4[%c0_23, %c0_24] : memref<32x32xf32, #tpu.memory_space<vmem>>, vector<32x32xf32>
      %cst_25 = arith.constant dense<0.000000e+00> : vector<8x32xf32>
      %42 = tpu.matmul %40, %41, %cst_25 {dimension_numbers = #tpu.dot_dimension_numbers<[1], [0], [0], [1], [0, 0, 1, 1], [], []>} : vector<8x32xf32>, vector<32x32xf32>, vector<8x32xf32> -> vector<8x32xf32>
      %c0_26 = arith.constant 0 : index
      %c0_27 = arith.constant 0 : index
      %43 = vector.load %arg5[%c0_26, %c0_27] : memref<32x32xf32, #tpu.memory_space<vmem>>, vector<32x32xf32>
      %cst_28 = arith.constant dense<0.000000e+00> : vector<8x32xf32>
      %44 = tpu.matmul %4, %43, %cst_28 {dimension_numbers = #tpu.dot_dimension_numbers<[1], [0], [0], [1], [0, 0, 1, 1], [], []>} : vector<8x32xf32>, vector<32x32xf32>, vector<8x32xf32> -> vector<8x32xf32>
      %45 = arith.addf %42, %44 : vector<8x32xf32>
      %c0_29 = arith.constant 0 : index
      %c0_30 = arith.constant 0 : index
      %46 = vector.load %arg6[%c0_29, %c0_30] : memref<1x32xf32, #tpu.memory_space<vmem>>, vector<1x32xf32>
      %47 = vector.broadcast %46 : vector<1x32xf32> to vector<8x32xf32>
      %48 = arith.addf %45, %47 : vector<8x32xf32>
      %49 = math.tanh %48 : vector<8x32xf32>
      %c0_31 = arith.constant 0 : index
      %c0_32 = arith.constant 0 : index
      %c0_33 = arith.constant 0 : index
      %50 = vector.load %arg7[%c0_31, %c0_32, %c0_33] : memref<8x1x32xf32, #tpu.memory_space<vmem>>, vector<8x1x32xf32>
      %51 = vector.shape_cast %50 : vector<8x1x32xf32> to vector<8x32xf32>
      %52 = vector.shape_cast %49 : vector<8x32xf32> to vector<8x1x32xf32>
      tpu.vector_store %arg7[%c0_31, %c0_32, %c0_33], %52 {strides = array<i32>} : memref<8x1x32xf32, #tpu.memory_space<vmem>>, vector<8x1x32xf32>,
      %53 = vector.broadcast %13 : vector<8x1xf32> to vector<8x8xf32>
      %54 = arith.subf %9, %53 : vector<8x8xf32>
      %55 = math.exp %54 : vector<8x8xf32>
      %56 = vector.broadcast %38 : vector<8x1xf32> to vector<8x8xf32>
      %57 = arith.mulf %55, %56 : vector<8x8xf32>
      %c0_34 = arith.constant 0 : index
      %c0_35 = arith.constant 0 : index
      %c0_36 = arith.constant 0 : index
      %58 = vector.load %arg8[%c0_34, %c0_35, %c0_36] : memref<8x1x8xf32, #tpu.memory_space<vmem>>, vector<8x1x8xf32>
      %59 = vector.shape_cast %58 : vector<8x1x8xf32> to vector<8x8xf32>
      %60 = vector.shape_cast %57 : vector<8x8xf32> to vector<8x1x8xf32>
      tpu.vector_store %arg8[%c0_34, %c0_35, %c0_36], %60 {strides = array<i32>} : memref<8x1x8xf32, #tpu.memory_space<vmem>>, vector<8x1x8xf32>,
    } else {
    }
    return
  }
  func.func @transform_0(%arg0: i32, %arg1: i32) -> (i32, i32, i32) {
    %c0_i32 = arith.constant 0 : i32
    %c0_i32_0 = arith.constant 0 : i32
    %c0_i32_1 = arith.constant 0 : i32
    return %arg0, %c0_i32, %c0_i32_0 : i32, i32, i32
  }
  func.func @transform_1(%arg0: i32, %arg1: i32) -> (i32, i32, i32) {
    %c0_i32 = arith.constant 0 : i32
    %c0_i32_0 = arith.constant 0 : i32
    return %arg0, %arg1, %c0_i32 : i32, i32, i32
  }
  func.func @transform_2(%arg0: i32, %arg1: i32) -> (i32, i32) {
    %c0_i32 = arith.constant 0 : i32
    %c0_i32_0 = arith.constant 0 : i32
    %c0_i32_1 = arith.constant 0 : i32
    return %c0_i32, %c0_i32_0 : i32, i32
  }
  func.func @transform_3(%arg0: i32, %arg1: i32) -> (i32, i32) {
    %c0_i32 = arith.constant 0 : i32
    %c0_i32_0 = arith.constant 0 : i32
    %c0_i32_1 = arith.constant 0 : i32
    return %c0_i32, %c0_i32_0 : i32, i32
  }
  func.func @transform_4(%arg0: i32, %arg1: i32) -> (i32, i32) {
    %c0_i32 = arith.constant 0 : i32
    %c0_i32_0 = arith.constant 0 : i32
    %c0_i32_1 = arith.constant 0 : i32
    return %c0_i32, %c0_i32_0 : i32, i32
  }
  func.func @transform_5(%arg0: i32, %arg1: i32) -> (i32, i32, i32) {
    %c0_i32 = arith.constant 0 : i32
    %c0_i32_0 = arith.constant 0 : i32
    %c0_i32_1 = arith.constant 0 : i32
    return %arg0, %c0_i32, %c0_i32_0 : i32, i32, i32
  }
  func.func @transform_6(%arg0: i32, %arg1: i32) -> (i32, i32, i32) {
    %c0_i32 = arith.constant 0 : i32
    %c0_i32_0 = arith.constant 0 : i32
    %c0_i32_1 = arith.constant 0 : i32
    return %arg0, %c0_i32, %c0_i32_0 : i32, i32, i32
  }
}

</mosaic_0001>

<llo_original>
// kernel: tpu_custom_call.1
$region0: #{tpu_custom_call.1}
  #allocation0 [shape = 'u32[]', space=smem, size = 0x4, offset = 0x4, fixed_abs, tag = 'smem constant byte address 0x4 - core index']
  #allocation1 [shape = 'u32[144,128]{1,0:T(1,128)}', space=vmem, size = 0x12000, scoped, tag = 'internal scratch']
  #allocation2 [shape = 'f32[8,1]{1,0:T(8,128)}', space=vmem, size = 0x1000, scoped, tag = 'scratch operand']
  #allocation3 [shape = 'f32[8,1]{1,0:T(8,128)}', space=vmem, size = 0x1000, scoped, tag = 'scratch operand']
  #allocation4 [shape = 'f32[8,32]{1,0:T(8,128)}', space=vmem, size = 0x1000, scoped, tag = 'scratch operand']
  %s0 = inlined_call_operand.hbm [shape: f32[8,1,32], index: 0, kind: input, shape index: {}]
  %s1 = inlined_call_operand.hbm [shape: f32[8,8,32], index: 1, kind: input, shape index: {}]
  %s2 = inlined_call_operand.hbm [shape: f32[32,32], index: 2, kind: input, shape index: {}]
  %s3 = inlined_call_operand.hbm [shape: f32[32,32], index: 3, kind: input, shape index: {}]
  %s4 = inlined_call_operand.vmem [shape: f32[1,32], index: 4, kind: input, shape index: {}]
  %s5 = inlined_call_operand.hbm [shape: f32[8,1,32], index: 5, kind: output, shape index: {0}]
  %s6 = inlined_call_operand.hbm [shape: f32[8,1,8], index: 6, kind: output, shape index: {1}]
  %7 = xla_tuple %s5, %s6
  %s8 = sld [smem:[#allocation0]]
  $region62: #{tpu_custom_call.1} parent=0
    _
  %s10 = ssub.s32 1, %s8
  %s11 = scalar_select 0, %s10, %s8
  $region1: #{tpu_custom_call.1} parent=0
    #allocation5 [shape = 'u8[4096]{0}', space=vmem, size = 0x1000, scoped, tag = 'input window, operand 0, single buffered']
    #allocation6 [shape = 's32[1]{0}', space=sflag, size = 0x4, scoped, tag = 'scoped memory for tpu_custom_call.1']
    #allocation7 [shape = 's32[1]{0}', space=sflag, size = 0x4, scoped, tag = 'scoped memory for tpu_custom_call.1']
    #allocation8 [shape = 'u8[32768]{0}', space=vmem, size = 0x8000, scoped, tag = 'input window, operand 1, single buffered']
    #allocation9 [shape = 's32[1]{0}', space=sflag, size = 0x4, scoped, tag = 'scoped memory for tpu_custom_call.1']
    #allocation10 [shape = 'u8[16384]{0}', space=vmem, size = 0x4000, scoped, tag = 'input window, operand 2, single buffered']
    #allocation11 [shape = 'u8[16384]{0}', space=vmem, size = 0x4000, scoped, tag = 'input window, operand 3, single buffered']
    #allocation12 [shape = 's32[1]{0}', space=sflag, size = 0x4, scoped, tag = 'scoped memory for tpu_custom_call.1']
    #allocation13 [shape = 'u8[4096]{0}', space=vmem, size = 0x1000, scoped, tag = 'output window, operand 0, single buffered']
    #allocation14 [shape = 'u8[4096]{0}', space=vmem, size = 0x1000, scoped, tag = 'output window, operand 1, single buffered']
    #allocation15 [shape = 's32[1]{0}', space=sflag, size = 0x4, scoped, tag = 'scoped memory for tpu_custom_call.1']
    %12 = vsyncpa [#allocation6], 0
    %13 = vsyncpa [#allocation9], 0
    %14 = vsyncpa [#allocation12], 0
    %15 = vsyncpa [#allocation7], 0
    %16 = vsyncpa [#allocation15], 0
    // Predicated region
    $region2: #{tpu_custom_call.1} parent=1 // pred_check
      _
    $region3: #{tpu_custom_call.1} parent=1 // pred_check_branch
      %18 = sbr.rel (0) target = $region5
    $region4: #{tpu_custom_call.1} parent=1 // pred_region
      %s20 = ssub.s32 128, 128
      %21 = vsyncadd [#allocation6], %s20
      %s22 = sshll.u32 [#allocation5], 4
      %s23 = int_to_ptr.vmem [resolvable:$true] %s22
      %28 = dma.hbm_to_vmem [thread:$0]  %s0, 128, %s23, [#allocation6], 16, 16, 1
    $region5: #{tpu_custom_call.1} parent=1 // pred_fallthru
      _
    // Predicated region
    $region6: #{tpu_custom_call.1} parent=1 // pred_check
      _
    $region7: #{tpu_custom_call.1} parent=1 // pred_check_branch
      %30 = sbr.rel (0) target = $region9
    $region8: #{tpu_custom_call.1} parent=1 // pred_region
      %s32 = ssub.s32 1024, 1024
      %33 = vsyncadd [#allocation9], %s32
      %s34 = sshll.u32 [#allocation8], 4
      %s35 = int_to_ptr.vmem [resolvable:$true] %s34
      %40 = dma.hbm_to_vmem [thread:$0]  %s1, 1024, %s35, [#allocation9], 128, 128, 8
    $region9: #{tpu_custom_call.1} parent=1 // pred_fallthru
      _
    // Predicated region
    $region10: #{tpu_custom_call.1} parent=1 // pred_check
      _
    $region11: #{tpu_custom_call.1} parent=1 // pred_check_branch
      %42 = sbr.rel (0) target = $region13
    $region12: #{tpu_custom_call.1} parent=1 // pred_region
      %s44 = ssub.s32 512, 512
      %45 = vsyncadd [#allocation9], %s44
      %s46 = sshll.u32 [#allocation10], 4
      %s47 = int_to_ptr.vmem [resolvable:$true] %s46
      %52 = dma.hbm_to_vmem [thread:$0]  %s2, 512, %s47, [#allocation9], 128, 128, 8
    $region13: #{tpu_custom_call.1} parent=1 // pred_fallthru
      _
    // Predicated region
    $region14: #{tpu_custom_call.1} parent=1 // pred_check
      _
    $region15: #{tpu_custom_call.1} parent=1 // pred_check_branch
      %54 = sbr.rel (0) target = $region17
    $region16: #{tpu_custom_call.1} parent=1 // pred_region
      %s56 = ssub.s32 512, 512
      %57 = vsyncadd [#allocation12], %s56
      %s58 = sshll.u32 [#allocation11], 4
      %s59 = int_to_ptr.vmem [resolvable:$true] %s58
      %64 = dma.hbm_to_vmem [thread:$0]  %s3, 512, %s59, [#allocation12], 128, 128, 8
    $region17: #{tpu_custom_call.1} parent=1 // pred_fallthru
      _
    // Predicated region
    $region18: #{tpu_custom_call.1} parent=1 // pred_check
      _
    $region19: #{tpu_custom_call.1} parent=1 // pred_check_branch
      %66 = sbr.rel (0) target = $region21
    $region20: #{tpu_custom_call.1} parent=1 // pred_region
      _
    $region21: #{tpu_custom_call.1} parent=1 // pred_fallthru
      _
    // Predicated region
    $region22: #{tpu_custom_call.1} parent=1 // pred_check
      _
    $region23: #{tpu_custom_call.1} parent=1 // pred_check_branch
      %68 = sbr.rel (0) target = $region25
    $region24: #{tpu_custom_call.1} parent=1 // pred_region
      %69 = dma.done [#allocation6], 128
    $region25: #{tpu_custom_call.1} parent=1 // pred_fallthru
      _
    // Predicated region
    $region26: #{tpu_custom_call.1} parent=1 // pred_check
      _
    $region27: #{tpu_custom_call.1} parent=1 // pred_check_branch
      %71 = sbr.rel (0) target = $region29
    $region28: #{tpu_custom_call.1} parent=1 // pred_region
      %72 = dma.done [#allocation9], 1024
    $region29: #{tpu_custom_call.1} parent=1 // pred_fallthru
      _
    // Predicated region
    $region30: #{tpu_custom_call.1} parent=1 // pred_check
      _
    $region31: #{tpu_custom_call.1} parent=1 // pred_check_branch
      %74 = sbr.rel (0) target = $region33
    $region32: #{tpu_custom_call.1} parent=1 // pred_region
      %75 = dma.done [#allocation9], 512
    $region33: #{tpu_custom_call.1} parent=1 // pred_fallthru
      _
    // Predicated region
    $region34: #{tpu_custom_call.1} parent=1 // pred_check
      _
    $region35: #{tpu_custom_call.1} parent=1 // pred_check_branch
      %77 = sbr.rel (0) target = $region37
    $region36: #{tpu_custom_call.1} parent=1 // pred_region
      %78 = dma.done [#allocation12], 512
    $region37: #{tpu_custom_call.1} parent=1 // pred_fallthru
      _
    %p79 = scmp.eq.s32.totalorder 0, 0
    // Predicated region
    $region38: #{tpu_custom_call.1} parent=1 // pred_check
      %p80 = pneg %p79
    $region39: #{tpu_custom_call.1} parent=1 // pred_check_branch
      %82 = sbr.rel (%p80) target = $region41
    $region40: #{tpu_custom_call.1} parent=1 // pred_region
      %vm83 = vcmask 7168
      %84 = vst.msk [vmem:[#allocation2] sm:$0xff] %vm83, -inf
      %85 = vst.msk [vmem:[#allocation3] sm:$0xff] %vm83, 0.0
      %vm86 = vcmask 261120
      %87 = vst.msk [vmem:[#allocation4] sm:$0xff] %vm86, 0.0
    $region41: #{tpu_custom_call.1} parent=1 // pred_fallthru
      _
    %v88 = vld [vmem:[#allocation5] sm:$0x1]
    %v89 = vld [vmem:[#allocation5 + $0x1] sm:$0x1]
    %v90 = vld [vmem:[#allocation5 + $0x2] sm:$0x1]
    %v91 = vld [vmem:[#allocation5 + $0x3] sm:$0x1]
    %v92 = vld [vmem:[#allocation5 + $0x4] sm:$0x1]
    %v93 = vld [vmem:[#allocation5 + $0x5] sm:$0x1]
    %v94 = vld [vmem:[#allocation5 + $0x6] sm:$0x1]
    %v95 = vld [vmem:[#allocation5 + $0x7] sm:$0x1]
    %v96 = vld [vmem:[#allocation8] sm:$0xff]
    %v97 = vld [vmem:[#allocation8 + $0x8] sm:$0xff]
    %v98 = vld [vmem:[#allocation8 + $0x10] sm:$0xff]
    %v99 = vld [vmem:[#allocation8 + $0x18] sm:$0xff]
    %v100 = vld [vmem:[#allocation8 + $0x20] sm:$0xff]
    %v101 = vld [vmem:[#allocation8 + $0x28] sm:$0xff]
    %v102 = vld [vmem:[#allocation8 + $0x30] sm:$0xff]
    %v103 = vld [vmem:[#allocation8 + $0x38] sm:$0xff]
    %v112 = vlaneseq
    %v113 = vshrl.u32 %v112, 7
    %v114 = vsub.s32 0, %v113
    %v115 = vrot.slane %v88, %v114
    %v116 = vlaneseq
    %v117 = vshrl.u32 %v116, 7
    %v118 = vsub.s32 0, %v117
    %v119 = vrot.slane %v89, %v118
    %v120 = vlaneseq
    %v121 = vshrl.u32 %v120, 7
    %v122 = vsub.s32 0, %v121
    %v123 = vrot.slane %v90, %v122
    %v124 = vlaneseq
    %v125 = vshrl.u32 %v124, 7
    %v126 = vsub.s32 0, %v125
    %v127 = vrot.slane %v91, %v126
    %v128 = vlaneseq
    %v129 = vshrl.u32 %v128, 7
    %v130 = vsub.s32 0, %v129
    %v131 = vrot.slane %v92, %v130
    %v132 = vlaneseq
    %v133 = vshrl.u32 %v132, 7
    %v134 = vsub.s32 0, %v133
    %v135 = vrot.slane %v93, %v134
    %v136 = vlaneseq
    %v137 = vshrl.u32 %v136, 7
    %v138 = vsub.s32 0, %v137
    %v139 = vrot.slane %v94, %v138
    %v140 = vlaneseq
    %v141 = vshrl.u32 %v140, 7
    %v142 = vsub.s32 0, %v141
    %v143 = vrot.slane %v95, %v142
    %v152 = vmul.f32 %v115, %v96
    %v153 = vmul.f32 %v119, %v97
    %v154 = vmul.f32 %v123, %v98
    %v155 = vmul.f32 %v127, %v99
    %v156 = vmul.f32 %v131, %v100
    %v157 = vmul.f32 %v135, %v101
    %v158 = vmul.f32 %v139, %v102
    %v159 = vmul.f32 %v143, %v103
    %vm160 = vcmask 261120
    %v161 = vsel %vm160, %v152, 0.0
    %162 = vadd.xlane.f32.xlu0 %v161
    %v163 = vpop.xlane.xlu0 %162
    %v164 = vsel %vm160, %v153, 0.0
    %165 = vadd.xlane.f32.xlu0 %v164
    %v166 = vpop.xlane.xlu0 %165
    %v167 = vsel %vm160, %v154, 0.0
    %168 = vadd.xlane.f32.xlu0 %v167
    %v169 = vpop.xlane.xlu0 %168
    %v170 = vsel %vm160, %v155, 0.0
    %171 = vadd.xlane.f32.xlu0 %v170
    %v172 = vpop.xlane.xlu0 %171
    %v173 = vsel %vm160, %v156, 0.0
    %174 = vadd.xlane.f32.xlu0 %v173
    %v175 = vpop.xlane.xlu0 %174
    %v176 = vsel %vm160, %v157, 0.0
    %177 = vadd.xlane.f32.xlu0 %v176
    %v178 = vpop.xlane.xlu0 %177
    %v179 = vsel %vm160, %v158, 0.0
    %180 = vadd.xlane.f32.xlu0 %v179
    %v181 = vpop.xlane.xlu0 %180
    %v182 = vsel %vm160, %v159, 0.0
    %183 = vadd.xlane.f32.xlu0 %v182
    %v184 = vpop.xlane.xlu0 %183
    %v185 = vld [vmem:[#allocation2] sm:$0xff]
    %v194 = vlaneseq
    %v195 = vand.u32 %v194, 127
    %v196 = vlaneseq
    %v197 = vshrl.u32 %v196, 7
    %v198 = vsub.s32 %v195, %v197
    %v199 = vrot.slane %v163, %v198
    %v200 = vlaneseq
    %v201 = vshrl.u32 %v200, 7
    %v202 = vsub.s32 %v195, %v201
    %v203 = vrot.slane %v166, %v202
    %v204 = vlaneseq
    %v205 = vshrl.u32 %v204, 7
    %v206 = vsub.s32 %v195, %v205
    %v207 = vrot.slane %v169, %v206
    %v208 = vlaneseq
    %v209 = vshrl.u32 %v208, 7
    %v210 = vsub.s32 %v195, %v209
    %v211 = vrot.slane %v172, %v210
    %v212 = vlaneseq
    %v213 = vshrl.u32 %v212, 7
    %v214 = vsub.s32 %v195, %v213
    %v215 = vrot.slane %v175, %v214
    %v216 = vlaneseq
    %v217 = vshrl.u32 %v216, 7
    %v218 = vsub.s32 %v195, %v217
    %v219 = vrot.slane %v178, %v218
    %v220 = vlaneseq
    %v221 = vshrl.u32 %v220, 7
    %v222 = vsub.s32 %v195, %v221
    %v223 = vrot.slane %v181, %v222
    %v224 = vlaneseq
    %v225 = vshrl.u32 %v224, 7
    %v226 = vsub.s32 %v195, %v225
    %v227 = vrot.slane %v184, %v226
    %vm228 = vcmask 1041409
    %v229 = vsel %vm228, %v203, %v199
    %vm230 = vcmask 1042434
    %v231 = vsel %vm230, %v207, %v229
    %vm232 = vcmask 1043459
    %v233 = vsel %vm232, %v211, %v231
    %vm234 = vcmask 1044484
    %v235 = vsel %vm234, %v215, %v233
    %vm236 = vcmask 1045509
    %v237 = vsel %vm236, %v219, %v235
    %vm238 = vcmask 1046534
    %v239 = vsel %vm238, %v223, %v237
    %vm240 = vcmask 1047559
    %v241 = vsel %vm240, %v227, %v239
    %vm243 = vcmask 64512
    %v244 = vsel %vm243, %v241, -inf
    %245 = vmax.xlane.f32.xlu0 %v244
    %v246 = vpop.xlane.xlu0 %245
    %v247 = vmax.f32 %v185, %v246
    %v248 = vsub.f32 %v185, %v247
    %v249 = vmul.f32 %v248, 1.442695
    %v250 = vpow.pop %v249
    %252 = vset.pattern.permute.xlu0 0
    %253 = vperm.xlu0 %252, %v247
    %v254 = vpop.permute.xlu0 %253
    %v255 = vlaneseq
    %v256 = vshrl.u32 %v255, 7
    %v257 = vsub.s32 0, %v256
    %v258 = vrot.slane %v254, %v257
    %v259 = vlaneseq
    %v260 = vshrl.u32 %v259, 7
    %v261 = vsub.s32 1, %v260
    %v262 = vrot.slane %v254, %v261
    %v263 = vlaneseq
    %v264 = vshrl.u32 %v263, 7
    %v265 = vsub.s32 2, %v264
    %v266 = vrot.slane %v254, %v265
    %v267 = vlaneseq
    %v268 = vshrl.u32 %v267, 7
    %v269 = vsub.s32 3, %v268
    %v270 = vrot.slane %v254, %v269
    %v271 = vlaneseq
    %v272 = vshrl.u32 %v271, 7
    %v273 = vsub.s32 4, %v272
    %v274 = vrot.slane %v254, %v273
    %v275 = vlaneseq
    %v276 = vshrl.u32 %v275, 7
    %v277 = vsub.s32 5, %v276
    %v278 = vrot.slane %v254, %v277
    %v279 = vlaneseq
    %v280 = vshrl.u32 %v279, 7
    %v281 = vsub.s32 6, %v280
    %v282 = vrot.slane %v254, %v281
    %v283 = vlaneseq
    %v284 = vshrl.u32 %v283, 7
    %v285 = vsub.s32 7, %v284
    %v286 = vrot.slane %v254, %v285
    %v295 = vsub.f32 %v163, %v258
    %v296 = vsub.f32 %v166, %v262
    %v297 = vsub.f32 %v169, %v266
    %v298 = vsub.f32 %v172, %v270
    %v299 = vsub.f32 %v175, %v274
    %v300 = vsub.f32 %v178, %v278
    %v301 = vsub.f32 %v181, %v282
    %v302 = vsub.f32 %v184, %v286
    %v303 = vmul.f32 %v295, 1.442695
    %v304 = vpow.pop %v303
    %v305 = vmul.f32 %v296, 1.442695
    %v306 = vpow.pop %v305
    %v307 = vmul.f32 %v297, 1.442695
    %v308 = vpow.pop %v307
    %v309 = vmul.f32 %v298, 1.442695
    %v310 = vpow.pop %v309
    %v311 = vmul.f32 %v299, 1.442695
    %v312 = vpow.pop %v311
    %v313 = vmul.f32 %v300, 1.442695
    %v314 = vpow.pop %v313
    %v315 = vmul.f32 %v301, 1.442695
    %v316 = vpow.pop %v315
    %v317 = vmul.f32 %v302, 1.442695
    %v318 = vpow.pop %v317
    %v319 = vld [vmem:[#allocation3] sm:$0xff]
    %v320 = vmul.f32 %v250, %v319
    %329 = vset.pattern.permute.xlu0 0
    %330 = vperm.xlu0 %329, %v304
    %v331 = vpop.permute.xlu0 %330
    %332 = vset.pattern.permute.xlu0 0
    %333 = vperm.xlu0 %332, %v306
    %v334 = vpop.permute.xlu0 %333
    %335 = vset.pattern.permute.xlu0 0
    %336 = vperm.xlu0 %335, %v308
    %v337 = vpop.permute.xlu0 %336
    %338 = vset.pattern.permute.xlu0 0
    %339 = vperm.xlu0 %338, %v310
    %v340 = vpop.permute.xlu0 %339
    %341 = vset.pattern.permute.xlu0 0
    %342 = vperm.xlu0 %341, %v312
    %v343 = vpop.permute.xlu0 %342
    %344 = vset.pattern.permute.xlu0 0
    %345 = vperm.xlu0 %344, %v314
    %v346 = vpop.permute.xlu0 %345
    %347 = vset.pattern.permute.xlu0 0
    %348 = vperm.xlu0 %347, %v316
    %v349 = vpop.permute.xlu0 %348
    %350 = vset.pattern.permute.xlu0 0
    %351 = vperm.xlu0 %350, %v318
    %v352 = vpop.permute.xlu0 %351
    %v353 = vlaneseq
    %v354 = vshrl.u32 %v353, 7
    %v355 = vsub.s32 %v195, %v354
    %v356 = vrot.slane %v331, %v355
    %v357 = vlaneseq
    %v358 = vshrl.u32 %v357, 7
    %v359 = vsub.s32 %v195, %v358
    %v360 = vrot.slane %v334, %v359
    %v361 = vlaneseq
    %v362 = vshrl.u32 %v361, 7
    %v363 = vsub.s32 %v195, %v362
    %v364 = vrot.slane %v337, %v363
    %v365 = vlaneseq
    %v366 = vshrl.u32 %v365, 7
    %v367 = vsub.s32 %v195, %v366
    %v368 = vrot.slane %v340, %v367
    %v369 = vlaneseq
    %v370 = vshrl.u32 %v369, 7
    %v371 = vsub.s32 %v195, %v370
    %v372 = vrot.slane %v343, %v371
    %v373 = vlaneseq
    %v374 = vshrl.u32 %v373, 7
    %v375 = vsub.s32 %v195, %v374
    %v376 = vrot.slane %v346, %v375
    %v377 = vlaneseq
    %v378 = vshrl.u32 %v377, 7
    %v379 = vsub.s32 %v195, %v378
    %v380 = vrot.slane %v349, %v379
    %v381 = vlaneseq
    %v382 = vshrl.u32 %v381, 7
    %v383 = vsub.s32 %v195, %v382
    %v384 = vrot.slane %v352, %v383
    %v385 = vsel %vm228, %v360, %v356
    %v386 = vsel %vm230, %v364, %v385
    %v387 = vsel %vm232, %v368, %v386
    %v388 = vsel %vm234, %v372, %v387
    %v389 = vsel %vm236, %v376, %v388
    %v390 = vsel %vm238, %v380, %v389
    %v391 = vsel %vm240, %v384, %v390
    %v393 = vsel %vm243, %v391, 0.0
    %394 = vadd.xlane.f32.xlu0 %v393
    %v395 = vpop.xlane.xlu0 %394
    %v396 = vadd.f32 %v320, %v395
    %v405 = vmul.f32 %v331, %v96
    %v406 = vmul.f32 %v334, %v97
    %v407 = vmul.f32 %v337, %v98
    %v408 = vmul.f32 %v340, %v99
    %v409 = vmul.f32 %v343, %v100
    %v410 = vmul.f32 %v346, %v101
    %v411 = vmul.f32 %v349, %v102
    %v412 = vmul.f32 %v352, %v103
    %v413 = vsel %vm160, %v405, 0.0
    %v414 = vrot.slane %v413, 4
    %v415 = vadd.f32 %v413, %v414
    %v416 = vrot.slane %v415, 2
    %v417 = vadd.f32 %v415, %v416
    %v418 = vrot.slane %v417, 1
    %v419 = vadd.f32 %v417, %v418
    %v420 = vsel %vm160, %v406, 0.0
    %v421 = vrot.slane %v420, 4
    %v422 = vadd.f32 %v420, %v421
    %v423 = vrot.slane %v422, 2
    %v424 = vadd.f32 %v422, %v423
    %v425 = vrot.slane %v424, 1
    %v426 = vadd.f32 %v424, %v425
    %v427 = vsel %vm160, %v407, 0.0
    %v428 = vrot.slane %v427, 4
    %v429 = vadd.f32 %v427, %v428
    %v430 = vrot.slane %v429, 2
    %v431 = vadd.f32 %v429, %v430
    %v432 = vrot.slane %v431, 1
    %v433 = vadd.f32 %v431, %v432
    %v434 = vsel %vm160, %v408, 0.0
    %v435 = vrot.slane %v434, 4
    %v436 = vadd.f32 %v434, %v435
    %v437 = vrot.slane %v436, 2
    %v438 = vadd.f32 %v436, %v437
    %v439 = vrot.slane %v438, 1
    %v440 = vadd.f32 %v438, %v439
    %v441 = vsel %vm160, %v409, 0.0
    %v442 = vrot.slane %v441, 4
    %v443 = vadd.f32 %v441, %v442
    %v444 = vrot.slane %v443, 2
    %v445 = vadd.f32 %v443, %v444
    %v446 = vrot.slane %v445, 1
    %v447 = vadd.f32 %v445, %v446
    %v448 = vsel %vm160, %v410, 0.0
    %v449 = vrot.slane %v448, 4
    %v450 = vadd.f32 %v448, %v449
    %v451 = vrot.slane %v450, 2
    %v452 = vadd.f32 %v450, %v451
    %v453 = vrot.slane %v452, 1
    %v454 = vadd.f32 %v452, %v453
    %v455 = vsel %vm160, %v411, 0.0
    %v456 = vrot.slane %v455, 4
    %v457 = vadd.f32 %v455, %v456
    %v458 = vrot.slane %v457, 2
    %v459 = vadd.f32 %v457, %v458
    %v460 = vrot.slane %v459, 1
    %v461 = vadd.f32 %v459, %v460
    %v462 = vsel %vm160, %v412, 0.0
    %v463 = vrot.slane %v462, 4
    %v464 = vadd.f32 %v462, %v463
    %v465 = vrot.slane %v464, 2
    %v466 = vadd.f32 %v464, %v465
    %v467 = vrot.slane %v466, 1
    %v468 = vadd.f32 %v466, %v467
    %v469 = vld [vmem:[#allocation4] sm:$0xff]
    %471 = vset.pattern.permute.xlu0 0
    %472 = vperm.xlu0 %471, %v250
    %v473 = vpop.permute.xlu0 %472
    %v475 = vmul.f32 %v473, %v469
    %v484 = vsel %vm228, %v426, %v419
    %v485 = vsel %vm230, %v433, %v484
    %v486 = vsel %vm232, %v440, %v485
    %v487 = vsel %vm234, %v447, %v486
    %v488 = vsel %vm236, %v454, %v487
    %v489 = vsel %vm238, %v461, %v488
    %v490 = vsel %vm240, %v468, %v489
    %v492 = vadd.f32 %v475, %v490
    %vm493 = vcmask 7168
    %494 = vst.msk [vmem:[#allocation2] sm:$0xff] %vm493, %v247
    %495 = vst.msk [vmem:[#allocation3] sm:$0xff] %vm493, %v396
    %496 = vst.msk [vmem:[#allocation4] sm:$0xff] %vm160, %v492
    // Predicated region
    $region42: #{tpu_custom_call.1} parent=1 // pred_check
      %p497 = pneg %p79
    $region43: #{tpu_custom_call.1} parent=1 // pred_check_branch
      %499 = sbr.rel (%p497) target = $region45
    $region44: #{tpu_custom_call.1} parent=1 // pred_region
      %v500 = vrcp.pop %v396
      %502 = vset.pattern.permute.xlu0 0
      %503 = vperm.xlu0 %502, %v500
      %v504 = vpop.permute.xlu0 %503
      %v506 = vmul.f32 %v492, %v504
      %v507 = vld [vmem:[#allocation10] sm:$0xff]
      %v508 = vld [vmem:[#allocation10 + $0x8] sm:$0xff]
      %v509 = vld [vmem:[#allocation10 + $0x10] sm:$0xff]
      %v510 = vld [vmem:[#allocation10 + $0x18] sm:$0xff]
      %v511 = vld [vmem:[#allocation11] sm:$0xff]
      %v512 = vld [vmem:[#allocation11 + $0x8] sm:$0xff]
      %v513 = vld [vmem:[#allocation11 + $0x10] sm:$0xff]
      %v514 = vld [vmem:[#allocation11 + $0x18] sm:$0xff]
      %v515 = vcombine.low %v88, %v89
      %v516 = vcombine.low %v90, %v91
      %v517 = vcombine.low %v92, %v93
      %v518 = vcombine.low %v94, %v95
      %v520 = vunpack.c.l.s4 1966171168
      %v521 = vunpack.c.0.s8 %v520
      %v522 = vlaneseq
      %v523 = vshrl.u32 %v522, 7
      %v524 = vsub.s32 %v521, %v523
      %v525 = vrot.slane %v515, %v524
      %v527 = vunpack.c.l.s4 1966171168
      %v528 = vunpack.c.0.s8 %v527
      %v529 = vlaneseq
      %v530 = vshrl.u32 %v529, 7
      %v531 = vsub.s32 %v528, %v530
      %v532 = vrot.slane %v516, %v531
      %v534 = vunpack.c.l.s4 1966171168
      %v535 = vunpack.c.0.s8 %v534
      %v536 = vlaneseq
      %v537 = vshrl.u32 %v536, 7
      %v538 = vsub.s32 %v535, %v537
      %v539 = vrot.slane %v517, %v538
      %v541 = vunpack.c.l.s4 1966171168
      %v542 = vunpack.c.0.s8 %v541
      %v543 = vlaneseq
      %v544 = vshrl.u32 %v543, 7
      %v545 = vsub.s32 %v542, %v544
      %v546 = vrot.slane %v518, %v545
      %v547 = vcombine.low %v525, %v532
      %v548 = vcombine.low %v539, %v546
      %v550 = vunpack.c.l.s4 1966171168
      %v551 = vunpack.c.0.s8 %v550
      %v552 = vlaneseq
      %v553 = vshrl.u32 %v552, 7
      %v554 = vsub.s32 %v551, %v553
      %v555 = vrot.slane %v547, %v554
      %v557 = vunpack.c.l.s4 1966171168
      %v558 = vunpack.c.0.s8 %v557
      %v559 = vlaneseq
      %v560 = vshrl.u32 %v559, 7
      %v561 = vsub.s32 %v558, %v560
      %v562 = vrot.slane %v548, %v561
      %v563 = vcombine.low %v555, %v562
      %v564 = vsel %vm160, %v563, 0
      %566 = vmatprep.subr.mxu0 0.0
      %567 = vmatpush1.msra.mxu0 %v511
      %568 = vmatprep.subr.mxu0 0.0
      %569 = vmatpush1.msra.mxu0 %v512
      %570 = vmatprep.subr.mxu0 0.0
      %571 = vmatpush1.msra.mxu0 %v513
      %572 = vmatprep.subr.mxu0 0.0
      %573 = vmatpush1.msra.mxu0 %v514
      %574 = vmatprep.subr.mxu0 0.0
      %575 = vmatpush1.msra.mxu0 0.0
      %576 = vmatprep.subr.mxu0 0.0
      %577 = vmatpush1.msra.mxu0 0.0
      %578 = vmatprep.subr.mxu0 0.0
      %579 = vmatpush1.msra.mxu0 0.0
      %580 = vmatprep.subr.mxu0 0.0
      %581 = vmatpush1.msra.mxu0 0.0
      %582 = vmatprep.subr.mxu0 0.0
      %583 = vmatpush1.msra.mxu0 0.0
      %584 = vmatprep.subr.mxu0 0.0
      %585 = vmatpush1.msra.mxu0 0.0
      %586 = vmatprep.subr.mxu0 0.0
      %587 = vmatpush1.msra.mxu0 0.0
      %588 = vmatprep.subr.mxu0 0.0
      %589 = vmatpush1.msra.mxu0 0.0
      %590 = vmatprep.subr.mxu0 0.0
      %591 = vmatpush1.msra.mxu0 0.0
      %592 = vmatprep.subr.mxu0 0.0
      %593 = vmatpush1.msra.mxu0 0.0
      %594 = vmatprep.subr.mxu0 0.0
      %595 = vmatpush1.msra.mxu0 0.0
      %596 = vmatprep.subr.mxu0 0.0
      %597 = vmatpush1.msra.mxu0 0.0
      %598 = vmatprep.subr.mxu0 0.0
      %599 = vmatpush1.msra.mxu0 0.0
      %600 = vmatprep.subr.mxu0 0.0
      %601 = vmatpush1.msra.mxu0 0.0
      %602 = vmatprep.subr.mxu0 0.0
      %603 = vmatpush1.msra.mxu0 0.0
      %604 = vmatprep.subr.mxu0 0.0
      %605 = vmatpush1.msra.mxu0 0.0
      %606 = vmatprep.subr.mxu0 0.0
      %607 = vmatpush1.msra.mxu0 0.0
      %608 = vmatprep.subr.mxu0 0.0
      %609 = vmatpush1.msra.mxu0 0.0
      %610 = vmatprep.subr.mxu0 0.0
      %611 = vmatpush1.msra.mxu0 0.0
      %612 = vmatprep.subr.mxu0 0.0
      %613 = vmatpush1.msra.mxu0 0.0
      %614 = vmatprep.subr.mxu0 0.0
      %615 = vmatpush1.msra.mxu0 0.0
      %616 = vmatprep.subr.mxu0 0.0
      %617 = vmatpush1.msra.mxu0 0.0
      %618 = vmatprep.subr.mxu0 0.0
      %619 = vmatpush1.msra.mxu0 0.0
      %620 = vmatprep.subr.mxu0 0.0
      %621 = vmatpush1.msra.mxu0 0.0
      %622 = vmatprep.subr.mxu0 0.0
      %623 = vmatpush1.msra.mxu0 0.0
      %624 = vmatprep.subr.mxu0 0.0
      %625 = vmatpush1.msra.mxu0 0.0
      %626 = vmatprep.subr.mxu0 0.0
      %627 = vmatpush1.msra.mxu0 0.0
      %628 = vmatprep.subr.mxu0 0.0
      %629 = vmatpush1.msra.mxu0 0.0
      %630 = vmatprep.mubr.f32.mxu0 0.0
      %631 = vmatmul.mubr.f32.gmra.mrb[0].mxu0 %v564
      %v632 = vpop.f32.mrb[0].mxu0
      %v633 = vadd.f32 0.0, %v632
      %v634 = vpop.f32.mrb[0].mxu0
      %635 = vdwg.mxu0
      %v637 = vsel %vm160, %v506, 0
      %639 = vmatprep.subr.mxu0 0.0
      %640 = vmatpush1.msra.mxu0 %v507
      %641 = vmatprep.subr.mxu0 0.0
      %642 = vmatpush1.msra.mxu0 %v508
      %643 = vmatprep.subr.mxu0 0.0
      %644 = vmatpush1.msra.mxu0 %v509
      %645 = vmatprep.subr.mxu0 0.0
      %646 = vmatpush1.msra.mxu0 %v510
      %647 = vmatprep.subr.mxu0 0.0
      %648 = vmatpush1.msra.mxu0 0.0
      %649 = vmatprep.subr.mxu0 0.0
      %650 = vmatpush1.msra.mxu0 0.0
      %651 = vmatprep.subr.mxu0 0.0
      %652 = vmatpush1.msra.mxu0 0.0
      %653 = vmatprep.subr.mxu0 0.0
      %654 = vmatpush1.msra.mxu0 0.0
      %655 = vmatprep.subr.mxu0 0.0
      %656 = vmatpush1.msra.mxu0 0.0
      %657 = vmatprep.subr.mxu0 0.0
      %658 = vmatpush1.msra.mxu0 0.0
      %659 = vmatprep.subr.mxu0 0.0
      %660 = vmatpush1.msra.mxu0 0.0
      %661 = vmatprep.subr.mxu0 0.0
      %662 = vmatpush1.msra.mxu0 0.0
      %663 = vmatprep.subr.mxu0 0.0
      %664 = vmatpush1.msra.mxu0 0.0
      %665 = vmatprep.subr.mxu0 0.0
      %666 = vmatpush1.msra.mxu0 0.0
      %667 = vmatprep.subr.mxu0 0.0
      %668 = vmatpush1.msra.mxu0 0.0
      %669 = vmatprep.subr.mxu0 0.0
      %670 = vmatpush1.msra.mxu0 0.0
      %671 = vmatprep.subr.mxu0 0.0
      %672 = vmatpush1.msra.mxu0 0.0
      %673 = vmatprep.subr.mxu0 0.0
      %674 = vmatpush1.msra.mxu0 0.0
      %675 = vmatprep.subr.mxu0 0.0
      %676 = vmatpush1.msra.mxu0 0.0
      %677 = vmatprep.subr.mxu0 0.0
      %678 = vmatpush1.msra.mxu0 0.0
      %679 = vmatprep.subr.mxu0 0.0
      %680 = vmatpush1.msra.mxu0 0.0
      %681 = vmatprep.subr.mxu0 0.0
      %682 = vmatpush1.msra.mxu0 0.0
      %683 = vmatprep.subr.mxu0 0.0
      %684 = vmatpush1.msra.mxu0 0.0
      %685 = vmatprep.subr.mxu0 0.0
      %686 = vmatpush1.msra.mxu0 0.0
      %687 = vmatprep.subr.mxu0 0.0
      %688 = vmatpush1.msra.mxu0 0.0
      %689 = vmatprep.subr.mxu0 0.0
      %690 = vmatpush1.msra.mxu0 0.0
      %691 = vmatprep.subr.mxu0 0.0
      %692 = vmatpush1.msra.mxu0 0.0
      %693 = vmatprep.subr.mxu0 0.0
      %694 = vmatpush1.msra.mxu0 0.0
      %695 = vmatprep.subr.mxu0 0.0
      %696 = vmatpush1.msra.mxu0 0.0
      %697 = vmatprep.subr.mxu0 0.0
      %698 = vmatpush1.msra.mxu0 0.0
      %699 = vmatprep.subr.mxu0 0.0
      %700 = vmatpush1.msra.mxu0 0.0
      %701 = vmatprep.subr.mxu0 0.0
      %702 = vmatpush1.msra.mxu0 0.0
      %703 = vmatprep.mubr.f32.mxu0 0.0
      %704 = vmatmul.mubr.f32.gmra.mrb[0].mxu0 %v637
      %v705 = vpop.f32.mrb[0].mxu0
      %v706 = vadd.f32 %v633, %v705
      %v707 = vpop.f32.mrb[0].mxu0
      %708 = vdwg.mxu0
      %v709 = vld [vmem:[%s4] sm:$0x1]
      %v711 = vlaneseq
      %v712 = vshrl.u32 %v711, 7
      %v713 = vsub.s32 0, %v712
      %v714 = vrot.slane %v709, %v713
      %v716 = vadd.f32 %v706, %v714
      %v717 = vtanh.pop %v716
      %v719 = vcombine.high %v717, %v717
      %v721 = vunpack.c.l.s4 1966171168
      %v722 = vunpack.c.0.s8 %v721
      %v723 = vlaneseq
      %v724 = vshrl.u32 %v723, 7
      %v725 = vsub.s32 %v722, %v724
      %v726 = vrot.slane %v717, %v725
      %v728 = vunpack.c.l.s4 1966171168
      %v729 = vunpack.c.0.s8 %v728
      %v730 = vlaneseq
      %v731 = vshrl.u32 %v730, 7
      %v732 = vsub.s32 %v729, %v731
      %v733 = vrot.slane %v719, %v732
      %v734 = vcombine.high %v726, %v726
      %v735 = vcombine.high %v733, %v733
      %v737 = vunpack.c.l.s4 1966171168
      %v738 = vunpack.c.0.s8 %v737
      %v739 = vlaneseq
      %v740 = vshrl.u32 %v739, 7
      %v741 = vsub.s32 %v738, %v740
      %v742 = vrot.slane %v726, %v741
      %v744 = vunpack.c.l.s4 1966171168
      %v745 = vunpack.c.0.s8 %v744
      %v746 = vlaneseq
      %v747 = vshrl.u32 %v746, 7
      %v748 = vsub.s32 %v745, %v747
      %v749 = vrot.slane %v733, %v748
      %v751 = vunpack.c.l.s4 1966171168
      %v752 = vunpack.c.0.s8 %v751
      %v753 = vlaneseq
      %v754 = vshrl.u32 %v753, 7
      %v755 = vsub.s32 %v752, %v754
      %v756 = vrot.slane %v734, %v755
      %v758 = vunpack.c.l.s4 1966171168
      %v759 = vunpack.c.0.s8 %v758
      %v760 = vlaneseq
      %v761 = vshrl.u32 %v760, 7
      %v762 = vsub.s32 %v759, %v761
      %v763 = vrot.slane %v735, %v762
      %v764 = vcombine.high %v742, %v742
      %v765 = vcombine.high %v749, %v749
      %v766 = vcombine.high %v756, %v756
      %v767 = vcombine.high %v763, %v763
      %vm776 = vcmask 253952
      %777 = vst.msk [vmem:[#allocation13] sm:$0x1] %vm776, %v742
      %778 = vst.msk [vmem:[#allocation13 + $0x1] sm:$0x1] %vm776, %v756
      %779 = vst.msk [vmem:[#allocation13 + $0x2] sm:$0x1] %vm776, %v764
      %780 = vst.msk [vmem:[#allocation13 + $0x3] sm:$0x1] %vm776, %v766
      %781 = vst.msk [vmem:[#allocation13 + $0x4] sm:$0x1] %vm776, %v749
      %782 = vst.msk [vmem:[#allocation13 + $0x5] sm:$0x1] %vm776, %v763
      %783 = vst.msk [vmem:[#allocation13 + $0x6] sm:$0x1] %vm776, %v765
      %784 = vst.msk [vmem:[#allocation13 + $0x7] sm:$0x1] %vm776, %v767
      %v785 = vlaneseq
      %v786 = vshrl.u32 %v785, 7
      %v787 = vsub.s32 0, %v786
      %v788 = vrot.slane %v504, %v787
      %v789 = vlaneseq
      %v790 = vshrl.u32 %v789, 7
      %v791 = vsub.s32 1, %v790
      %v792 = vrot.slane %v504, %v791
      %v793 = vlaneseq
      %v794 = vshrl.u32 %v793, 7
      %v795 = vsub.s32 2, %v794
      %v796 = vrot.slane %v504, %v795
      %v797 = vlaneseq
      %v798 = vshrl.u32 %v797, 7
      %v799 = vsub.s32 3, %v798
      %v800 = vrot.slane %v504, %v799
      %v801 = vlaneseq
      %v802 = vshrl.u32 %v801, 7
      %v803 = vsub.s32 4, %v802
      %v804 = vrot.slane %v504, %v803
      %v805 = vlaneseq
      %v806 = vshrl.u32 %v805, 7
      %v807 = vsub.s32 5, %v806
      %v808 = vrot.slane %v504, %v807
      %v809 = vlaneseq
      %v810 = vshrl.u32 %v809, 7
      %v811 = vsub.s32 6, %v810
      %v812 = vrot.slane %v504, %v811
      %v813 = vlaneseq
      %v814 = vshrl.u32 %v813, 7
      %v815 = vsub.s32 7, %v814
      %v816 = vrot.slane %v504, %v815
      %v825 = vmul.f32 %v304, %v788
      %v826 = vmul.f32 %v306, %v792
      %v827 = vmul.f32 %v308, %v796
      %v828 = vmul.f32 %v310, %v800
      %v829 = vmul.f32 %v312, %v804
      %v830 = vmul.f32 %v314, %v808
      %v831 = vmul.f32 %v316, %v812
      %v832 = vmul.f32 %v318, %v816
      %841 = vset.pattern.permute.xlu0 0
      %842 = vperm.xlu0 %841, %v825
      %v843 = vpop.permute.xlu0 %842
      %844 = vset.pattern.permute.xlu0 0
      %845 = vperm.xlu0 %844, %v826
      %v846 = vpop.permute.xlu0 %845
      %847 = vset.pattern.permute.xlu0 0
      %848 = vperm.xlu0 %847, %v827
      %v849 = vpop.permute.xlu0 %848
      %850 = vset.pattern.permute.xlu0 0
      %851 = vperm.xlu0 %850, %v828
      %v852 = vpop.permute.xlu0 %851
      %853 = vset.pattern.permute.xlu0 0
      %854 = vperm.xlu0 %853, %v829
      %v855 = vpop.permute.xlu0 %854
      %856 = vset.pattern.permute.xlu0 0
      %857 = vperm.xlu0 %856, %v830
      %v858 = vpop.permute.xlu0 %857
      %859 = vset.pattern.permute.xlu0 0
      %860 = vperm.xlu0 %859, %v831
      %v861 = vpop.permute.xlu0 %860
      %862 = vset.pattern.permute.xlu0 0
      %863 = vperm.xlu0 %862, %v832
      %v864 = vpop.permute.xlu0 %863
      %v865 = vlaneseq
      %v866 = vshrl.u32 %v865, 7
      %v867 = vsub.s32 %v195, %v866
      %v868 = vrot.slane %v843, %v867
      %v869 = vlaneseq
      %v870 = vshrl.u32 %v869, 7
      %v871 = vsub.s32 %v195, %v870
      %v872 = vrot.slane %v846, %v871
      %v873 = vlaneseq
      %v874 = vshrl.u32 %v873, 7
      %v875 = vsub.s32 %v195, %v874
      %v876 = vrot.slane %v849, %v875
      %v877 = vlaneseq
      %v878 = vshrl.u32 %v877, 7
      %v879 = vsub.s32 %v195, %v878
      %v880 = vrot.slane %v852, %v879
      %v881 = vlaneseq
      %v882 = vshrl.u32 %v881, 7
      %v883 = vsub.s32 %v195, %v882
      %v884 = vrot.slane %v855, %v883
      %v885 = vlaneseq
      %v886 = vshrl.u32 %v885, 7
      %v887 = vsub.s32 %v195, %v886
      %v888 = vrot.slane %v858, %v887
      %v889 = vlaneseq
      %v890 = vshrl.u32 %v889, 7
      %v891 = vsub.s32 %v195, %v890
      %v892 = vrot.slane %v861, %v891
      %v893 = vlaneseq
      %v894 = vshrl.u32 %v893, 7
      %v895 = vsub.s32 %v195, %v894
      %v896 = vrot.slane %v864, %v895
      %vm905 = vcmask 57344
      %906 = vst.msk [vmem:[#allocation14] sm:$0x1] %vm905, %v868
      %907 = vst.msk [vmem:[#allocation14 + $0x1] sm:$0x1] %vm905, %v872
      %908 = vst.msk [vmem:[#allocation14 + $0x2] sm:$0x1] %vm905, %v876
      %909 = vst.msk [vmem:[#allocation14 + $0x3] sm:$0x1] %vm905, %v880
      %910 = vst.msk [vmem:[#allocation14 + $0x4] sm:$0x1] %vm905, %v884
      %911 = vst.msk [vmem:[#allocation14 + $0x5] sm:$0x1] %vm905, %v888
      %912 = vst.msk [vmem:[#allocation14 + $0x6] sm:$0x1] %vm905, %v892
      %913 = vst.msk [vmem:[#allocation14 + $0x7] sm:$0x1] %vm905, %v896
    $region45: #{tpu_custom_call.1} parent=1 // pred_fallthru
      _
    // Predicated region
    $region46: #{tpu_custom_call.1} parent=1 // pred_check
      _
    $region47: #{tpu_custom_call.1} parent=1 // pred_check_branch
      %915 = sbr.rel (0) target = $region49
    $region48: #{tpu_custom_call.1} parent=1 // pred_region
      %s917 = ssub.s32 128, 128
      %918 = vsyncadd [#allocation7], %s917
      %s919 = sshll.u32 [#allocation13], 4
      %s920 = int_to_ptr.vmem [resolvable:$true] %s919
      %925 = dma.vmem_to_hbm [thread:$0]  %s920, 128, %s5, [#allocation7], 16, 16, 1
    $region49: #{tpu_custom_call.1} parent=1 // pred_fallthru
      _
    // Predicated region
    $region50: #{tpu_custom_call.1} parent=1 // pred_check
      _
    $region51: #{tpu_custom_call.1} parent=1 // pred_check_branch
      %927 = sbr.rel (0) target = $region53
    $region52: #{tpu_custom_call.1} parent=1 // pred_region
      %s929 = ssub.s32 128, 128
      %930 = vsyncadd [#allocation15], %s929
      %s931 = sshll.u32 [#allocation14], 4
      %s932 = int_to_ptr.vmem [resolvable:$true] %s931
      %937 = dma.vmem_to_hbm [thread:$0]  %s932, 128, %s6, [#allocation15], 16, 16, 1
    $region53: #{tpu_custom_call.1} parent=1 // pred_fallthru
      _
    // Predicated region
    $region54: #{tpu_custom_call.1} parent=1 // pred_check
      _
    $region55: #{tpu_custom_call.1} parent=1 // pred_check_branch
      %939 = sbr.rel (0) target = $region57
    $region56: #{tpu_custom_call.1} parent=1 // pred_region
      %940 = dma.done [#allocation7], 128
    $region57: #{tpu_custom_call.1} parent=1 // pred_fallthru
      _
    // Predicated region
    $region58: #{tpu_custom_call.1} parent=1 // pred_check
      _
    $region59: #{tpu_custom_call.1} parent=1 // pred_check_branch
      %942 = sbr.rel (0) target = $region61
    $region60: #{tpu_custom_call.1} parent=1 // pred_region
      %943 = dma.done [#allocation15], 128
    $region61: #{tpu_custom_call.1} parent=1 // pred_fallthru
      _
    %944 = vsyncpa [#allocation6], 1
    %945 = vsyncpa [#allocation9], 1
    %946 = vsyncpa [#allocation12], 1
    %947 = vsyncpa [#allocation7], 1
    %948 = vsyncpa [#allocation15], 1

// kernel: tpu_custom_call.1
$region0: #{tpu_custom_call.1}
  #allocation0 [shape = 'u32[]', space=smem, size = 0x4, offset = 0x4, fixed_abs, tag = 'smem constant byte address 0x4 - core index']
  #allocation1 [shape = 'u32[144,128]{1,0:T(1,128)}', space=vmem, size = 0x12000, scoped, tag = 'internal scratch']
  #allocation2 [shape = 'f32[8,1]{1,0:T(8,128)}', space=vmem, size = 0x1000, scoped, tag = 'scratch operand']
  #allocation3 [shape = 'f32[8,1]{1,0:T(8,128)}', space=vmem, size = 0x1000, scoped, tag = 'scratch operand']
  #allocation4 [shape = 'f32[8,32]{1,0:T(8,128)}', space=vmem, size = 0x1000, scoped, tag = 'scratch operand']
  %s0 = inlined_call_operand.hbm [shape: f32[8,1,32], index: 0, kind: input, shape index: {}]
  %s1 = inlined_call_operand.hbm [shape: f32[8,8,32], index: 1, kind: input, shape index: {}]
  %s2 = inlined_call_operand.hbm [shape: f32[32,32], index: 2, kind: input, shape index: {}]
  %s3 = inlined_call_operand.hbm [shape: f32[32,32], index: 3, kind: input, shape index: {}]
  %s4 = inlined_call_operand.vmem [shape: f32[1,32], index: 4, kind: input, shape index: {}]
  %s5 = inlined_call_operand.hbm [shape: f32[8,1,32], index: 5, kind: output, shape index: {0}]
  %s6 = inlined_call_operand.hbm [shape: f32[8,1,8], index: 6, kind: output, shape index: {1}]
  %7 = xla_tuple %s5, %s6
  %s8 = sld [smem:[#allocation0]]
  $region62: #{tpu_custom_call.1} parent=0
    _
  %s10 = ssub.s32 1, %s8
  %s11 = scalar_select 0, %s10, %s8
  $region1: #{tpu_custom_call.1} parent=0
    #allocation5 [shape = 'u8[4096]{0}', space=vmem, size = 0x1000, scoped, tag = 'input window, operand 0, single buffered']
    #allocation6 [shape = 's32[1]{0}', space=sflag, size = 0x4, scoped, tag = 'scoped memory for tpu_custom_call.1']
    #allocation7 [shape = 's32[1]{0}', space=sflag, size = 0x4, scoped, tag = 'scoped memory for tpu_custom_call.1']
    #allocation8 [shape = 'u8[32768]{0}', space=vmem, size = 0x8000, scoped, tag = 'input window, operand 1, single buffered']
    #allocation9 [shape = 's32[1]{0}', space=sflag, size = 0x4, scoped, tag = 'scoped memory for tpu_custom_call.1']
    #allocation10 [shape = 'u8[16384]{0}', space=vmem, size = 0x4000, scoped, tag = 'input window, operand 2, single buffered']
    #allocation11 [shape = 'u8[16384]{0}', space=vmem, size = 0x4000, scoped, tag = 'input window, operand 3, single buffered']
    #allocation12 [shape = 's32[1]{0}', space=sflag, size = 0x4, scoped, tag = 'scoped memory for tpu_custom_call.1']
    #allocation13 [shape = 'u8[4096]{0}', space=vmem, size = 0x1000, scoped, tag = 'output window, operand 0, single buffered']
    #allocation14 [shape = 'u8[4096]{0}', space=vmem, size = 0x1000, scoped, tag = 'output window, operand 1, single buffered']
    #allocation15 [shape = 's32[1]{0}', space=sflag, size = 0x4, scoped, tag = 'scoped memory for tpu_custom_call.1']
    %12 = vsyncpa [#allocation6], 0
    %13 = vsyncpa [#allocation9], 0
    %14 = vsyncpa [#allocation12], 0
    %15 = vsyncpa [#allocation7], 0
    %16 = vsyncpa [#allocation15], 0
    // Predicated region
    $region2: #{tpu_custom_call.1} parent=1 // pred_check
      _
    $region3: #{tpu_custom_call.1} parent=1 // pred_check_branch
      %18 = sbr.rel (0) target = $region5
    $region4: #{tpu_custom_call.1} parent=1 // pred_region
      %s20 = ssub.s32 128, 128
      %21 = vsyncadd [#allocation6], %s20
      %s22 = sshll.u32 [#allocation5], 4
      %s23 = int_to_ptr.vmem [resolvable:$true] %s22
      %28 = dma.hbm_to_vmem [thread:$0]  %s0, 128, %s23, [#allocation6], 16, 16, 1
    $region5: #{tpu_custom_call.1} parent=1 // pred_fallthru
      _
    // Predicated region
    $region6: #{tpu_custom_call.1} parent=1 // pred_check
      _
    $region7: #{tpu_custom_call.1} parent=1 // pred_check_branch
      %30 = sbr.rel (0) target = $region9
    $region8: #{tpu_custom_call.1} parent=1 // pred_region
      %s32 = ssub.s32 1024, 1024
      %33 = vsyncadd [#allocation9], %s32
      %s34 = sshll.u32 [#allocation8], 4
      %s35 = int_to_ptr.vmem [resolvable:$true] %s34
      %40 = dma.hbm_to_vmem [thread:$0]  %s1, 1024, %s35, [#allocation9], 128, 128, 8
    $region9: #{tpu_custom_call.1} parent=1 // pred_fallthru
      _
    // Predicated region
    $region10: #{tpu_custom_call.1} parent=1 // pred_check
      _
    $region11: #{tpu_custom_call.1} parent=1 // pred_check_branch
      %42 = sbr.rel (0) target = $region13
    $region12: #{tpu_custom_call.1} parent=1 // pred_region
      %s44 = ssub.s32 512, 512
      %45 = vsyncadd [#allocation9], %s44
      %s46 = sshll.u32 [#allocation10], 4
      %s47 = int_to_ptr.vmem [resolvable:$true] %s46
      %52 = dma.hbm_to_vmem [thread:$0]  %s2, 512, %s47, [#allocation9], 128, 128, 8
    $region13: #{tpu_custom_call.1} parent=1 // pred_fallthru
      _
    // Predicated region
    $region14: #{tpu_custom_call.1} parent=1 // pred_check
      _
    $region15: #{tpu_custom_call.1} parent=1 // pred_check_branch
      %54 = sbr.rel (0) target = $region17
    $region16: #{tpu_custom_call.1} parent=1 // pred_region
      %s56 = ssub.s32 512, 512
      %57 = vsyncadd [#allocation12], %s56
      %s58 = sshll.u32 [#allocation11], 4
      %s59 = int_to_ptr.vmem [resolvable:$true] %s58
      %64 = dma.hbm_to_vmem [thread:$0]  %s3, 512, %s59, [#allocation12], 128, 128, 8
    $region17: #{tpu_custom_call.1} parent=1 // pred_fallthru
      _
    // Predicated region
    $region18: #{tpu_custom_call.1} parent=1 // pred_check
      _
    $region19: #{tpu_custom_call.1} parent=1 // pred_check_branch
      %66 = sbr.rel (0) target = $region21
    $region20: #{tpu_custom_call.1} parent=1 // pred_region
      _
    $region21: #{tpu_custom_call.1} parent=1 // pred_fallthru
      _
    // Predicated region
    $region22: #{tpu_custom_call.1} parent=1 // pred_check
      _
    $region23: #{tpu_custom_call.1} parent=1 // pred_check_branch
      %68 = sbr.rel (0) target = $region25
    $region24: #{tpu_custom_call.1} parent=1 // pred_region
      %69 = dma.done [#allocation6], 128
    $region25: #{tpu_custom_call.1} parent=1 // pred_fallthru
      _
    // Predicated region
    $region26: #{tpu_custom_call.1} parent=1 // pred_check
      _
    $region27: #{tpu_custom_call.1} parent=1 // pred_check_branch
      %71 = sbr.rel (0) target = $region29
    $region28: #{tpu_custom_call.1} parent=1 // pred_region
      %72 = dma.done [#allocation9], 1024
    $region29: #{tpu_custom_call.1} parent=1 // pred_fallthru
      _
    // Predicated region
    $region30: #{tpu_custom_call.1} parent=1 // pred_check
      _
    $region31: #{tpu_custom_call.1} parent=1 // pred_check_branch
      %74 = sbr.rel (0) target = $region33
    $region32: #{tpu_custom_call.1} parent=1 // pred_region
      %75 = dma.done [#allocation9], 512
    $region33: #{tpu_custom_call.1} parent=1 // pred_fallthru
      _
    // Predicated region
    $region34: #{tpu_custom_call.1} parent=1 // pred_check
      _
    $region35: #{tpu_custom_call.1} parent=1 // pred_check_branch
      %77 = sbr.rel (0) target = $region37
    $region36: #{tpu_custom_call.1} parent=1 // pred_region
      %78 = dma.done [#allocation12], 512
    $region37: #{tpu_custom_call.1} parent=1 // pred_fallthru
      _
    %p79 = scmp.eq.s32.totalorder 0, 0
    // Predicated region
    $region38: #{tpu_custom_call.1} parent=1 // pred_check
      %p80 = pneg %p79
    $region39: #{tpu_custom_call.1} parent=1 // pred_check_branch
      %82 = sbr.rel (%p80) target = $region41
    $region40: #{tpu_custom_call.1} parent=1 // pred_region
      %vm83 = vcmask 7168
      %84 = vst.msk [vmem:[#allocation2] sm:$0xff] %vm83, -inf
      %85 = vst.msk [vmem:[#allocation3] sm:$0xff] %vm83, 0.0
      %vm86 = vcmask 261120
      %87 = vst.msk [vmem:[#allocation4] sm:$0xff] %vm86, 0.0
    $region41: #{tpu_custom_call.1} parent=1 // pred_fallthru
      _
    %v88 = vld [vmem:[#allocation5] sm:$0x1]
    %v89 = vld [vmem:[#allocation5 + $0x1] sm:$0x1]
    %v90 = vld [vmem:[#allocation5 + $0x2] sm:$0x1]
    %v91 = vld [vmem:[#allocation5 + $0x3] sm:$0x1]
    %v92 = vld [vmem:[#allocation5 + $0x4] sm:$0x1]
    %v93 = vld [vmem:[#allocation5 + $0x5] sm:$0x1]
    %v94 = vld [vmem:[#allocation5 + $0x6] sm:$0x1]
    %v95 = vld [vmem:[#allocation5 + $0x7] sm:$0x1]
    %v96 = vld [vmem:[#allocation8] sm:$0xff]
    %v97 = vld [vmem:[#allocation8 + $0x8] sm:$0xff]
    %v98 = vld [vmem:[#allocation8 + $0x10] sm:$0xff]
    %v99 = vld [vmem:[#allocation8 + $0x18] sm:$0xff]
    %v100 = vld [vmem:[#allocation8 + $0x20] sm:$0xff]
    %v101 = vld [vmem:[#allocation8 + $0x28] sm:$0xff]
    %v102 = vld [vmem:[#allocation8 + $0x30] sm:$0xff]
    %v103 = vld [vmem:[#allocation8 + $0x38] sm:$0xff]
    %v112 = vlaneseq
    %v113 = vshrl.u32 %v112, 7
    %v114 = vsub.s32 0, %v113
    %v115 = vrot.slane %v88, %v114
    %v116 = vlaneseq
    %v117 = vshrl.u32 %v116, 7
    %v118 = vsub.s32 0, %v117
    %v119 = vrot.slane %v89, %v118
    %v120 = vlaneseq
    %v121 = vshrl.u32 %v120, 7
    %v122 = vsub.s32 0, %v121
    %v123 = vrot.slane %v90, %v122
    %v124 = vlaneseq
    %v125 = vshrl.u32 %v124, 7
    %v126 = vsub.s32 0, %v125
    %v127 = vrot.slane %v91, %v126
    %v128 = vlaneseq
    %v129 = vshrl.u32 %v128, 7
    %v130 = vsub.s32 0, %v129
    %v131 = vrot.slane %v92, %v130
    %v132 = vlaneseq
    %v133 = vshrl.u32 %v132, 7
    %v134 = vsub.s32 0, %v133
    %v135 = vrot.slane %v93, %v134
    %v136 = vlaneseq
    %v137 = vshrl.u32 %v136, 7
    %v138 = vsub.s32 0, %v137
    %v139 = vrot.slane %v94, %v138
    %v140 = vlaneseq
    %v141 = vshrl.u32 %v140, 7
    %v142 = vsub.s32 0, %v141
    %v143 = vrot.slane %v95, %v142
    %v152 = vmul.f32 %v115, %v96
    %v153 = vmul.f32 %v119, %v97
    %v154 = vmul.f32 %v123, %v98
    %v155 = vmul.f32 %v127, %v99
    %v156 = vmul.f32 %v131, %v100
    %v157 = vmul.f32 %v135, %v101
    %v158 = vmul.f32 %v139, %v102
    %v159 = vmul.f32 %v143, %v103
    %vm160 = vcmask 261120
    %v161 = vsel %vm160, %v152, 0.0
    %162 = vadd.xlane.f32.xlu0 %v161
    %v163 = vpop.xlane.xlu0 %162
    %v164 = vsel %vm160, %v153, 0.0
    %165 = vadd.xlane.f32.xlu0 %v164
    %v166 = vpop.xlane.xlu0 %165
    %v167 = vsel %vm160, %v154, 0.0
    %168 = vadd.xlane.f32.xlu0 %v167
    %v169 = vpop.xlane.xlu0 %168
    %v170 = vsel %vm160, %v155, 0.0
    %171 = vadd.xlane.f32.xlu0 %v170
    %v172 = vpop.xlane.xlu0 %171
    %v173 = vsel %vm160, %v156, 0.0
    %174 = vadd.xlane.f32.xlu0 %v173
    %v175 = vpop.xlane.xlu0 %174
    %v176 = vsel %vm160, %v157, 0.0
    %177 = vadd.xlane.f32.xlu0 %v176
    %v178 = vpop.xlane.xlu0 %177
    %v179 = vsel %vm160, %v158, 0.0
    %180 = vadd.xlane.f32.xlu0 %v179
    %v181 = vpop.xlane.xlu0 %180
    %v182 = vsel %vm160, %v159, 0.0
    %183 = vadd.xlane.f32.xlu0 %v182
    %v184 = vpop.xlane.xlu0 %183
    %v185 = vld [vmem:[#allocation2] sm:$0xff]
    %v194 = vlaneseq
    %v195 = vand.u32 %v194, 127
    %v196 = vlaneseq
    %v197 = vshrl.u32 %v196, 7
    %v198 = vsub.s32 %v195, %v197
    %v199 = vrot.slane %v163, %v198
    %v200 = vlaneseq
    %v201 = vshrl.u32 %v200, 7
    %v202 = vsub.s32 %v195, %v201
    %v203 = vrot.slane %v166, %v202
    %v204 = vlaneseq
    %v205 = vshrl.u32 %v204, 7
    %v206 = vsub.s32 %v195, %v205
    %v207 = vrot.slane %v169, %v206
    %v208 = vlaneseq
    %v209 = vshrl.u32 %v208, 7
    %v210 = vsub.s32 %v195, %v209
    %v211 = vrot.slane %v172, %v210
    %v212 = vlaneseq
    %v213 = vshrl.u32 %v212, 7
    %v214 = vsub.s32 %v195, %v213
    %v215 = vrot.slane %v175, %v214
    %v216 = vlaneseq
    %v217 = vshrl.u32 %v216, 7
    %v218 = vsub.s32 %v195, %v217
    %v219 = vrot.slane %v178, %v218
    %v220 = vlaneseq
    %v221 = vshrl.u32 %v220, 7
    %v222 = vsub.s32 %v195, %v221
    %v223 = vrot.slane %v181, %v222
    %v224 = vlaneseq
    %v225 = vshrl.u32 %v224, 7
    %v226 = vsub.s32 %v195, %v225
    %v227 = vrot.slane %v184, %v226
    %vm228 = vcmask 1041409
    %v229 = vsel %vm228, %v203, %v199
    %vm230 = vcmask 1042434
    %v231 = vsel %vm230, %v207, %v229
    %vm232 = vcmask 1043459
    %v233 = vsel %vm232, %v211, %v231
    %vm234 = vcmask 1044484
    %v235 = vsel %vm234, %v215, %v233
    %vm236 = vcmask 1045509
    %v237 = vsel %vm236, %v219, %v235
    %vm238 = vcmask 1046534
    %v239 = vsel %vm238, %v223, %v237
    %vm240 = vcmask 1047559
    %v241 = vsel %vm240, %v227, %v239
    %vm243 = vcmask 64512
    %v244 = vsel %vm243, %v241, -inf
    %245 = vmax.xlane.f32.xlu0 %v244
    %v246 = vpop.xlane.xlu0 %245
    %v247 = vmax.f32 %v185, %v246
    %v248 = vsub.f32 %v185, %v247
    %v249 = vmul.f32 %v248, 1.442695
    %v250 = vpow.pop %v249
    %252 = vset.pattern.permute.xlu0 0
    %253 = vperm.xlu0 %252, %v247
    %v254 = vpop.permute.xlu0 %253
    %v255 = vlaneseq
    %v256 = vshrl.u32 %v255, 7
    %v257 = vsub.s32 0, %v256
    %v258 = vrot.slane %v254, %v257
    %v259 = vlaneseq
    %v260 = vshrl.u32 %v259, 7
    %v261 = vsub.s32 1, %v260
    %v262 = vrot.slane %v254, %v261
    %v263 = vlaneseq
    %v264 = vshrl.u32 %v263, 7
    %v265 = vsub.s32 2, %v264
    %v266 = vrot.slane %v254, %v265
    %v267 = vlaneseq
    %v268 = vshrl.u32 %v267, 7
    %v269 = vsub.s32 3, %v268
    %v270 = vrot.slane %v254, %v269
    %v271 = vlaneseq
    %v272 = vshrl.u32 %v271, 7
    %v273 = vsub.s32 4, %v272
    %v274 = vrot.slane %v254, %v273
    %v275 = vlaneseq
    %v276 = vshrl.u32 %v275, 7
    %v277 = vsub.s32 5, %v276
    %v278 = vrot.slane %v254, %v277
    %v279 = vlaneseq
    %v280 = vshrl.u32 %v279, 7
    %v281 = vsub.s32 6, %v280
    %v282 = vrot.slane %v254, %v281
    %v283 = vlaneseq
    %v284 = vshrl.u32 %v283, 7
    %v285 = vsub.s32 7, %v284
    %v286 = vrot.slane %v254, %v285
    %v295 = vsub.f32 %v163, %v258
    %v296 = vsub.f32 %v166, %v262
    %v297 = vsub.f32 %v169, %v266
    %v298 = vsub.f32 %v172, %v270
    %v299 = vsub.f32 %v175, %v274
    %v300 = vsub.f32 %v178, %v278
    %v301 = vsub.f32 %v181, %v282
    %v302 = vsub.f32 %v184, %v286
    %v303 = vmul.f32 %v295, 1.442695
    %v304 = vpow.pop %v303
    %v305 = vmul.f32 %v296, 1.442695
    %v306 = vpow.pop %v305
    %v307 = vmul.f32 %v297, 1.442695
    %v308 = vpow.pop %v307
    %v309 = vmul.f32 %v298, 1.442695
    %v310 = vpow.pop %v309
    %v311 = vmul.f32 %v299, 1.442695
    %v312 = vpow.pop %v311
    %v313 = vmul.f32 %v300, 1.442695
    %v314 = vpow.pop %v313
    %v315 = vmul.f32 %v301, 1.442695
    %v316 = vpow.pop %v315
    %v317 = vmul.f32 %v302, 1.442695
    %v318 = vpow.pop %v317
    %v319 = vld [vmem:[#allocation3] sm:$0xff]
    %v320 = vmul.f32 %v250, %v319
    %329 = vset.pattern.permute.xlu0 0
    %330 = vperm.xlu0 %329, %v304
    %v331 = vpop.permute.xlu0 %330
    %332 = vset.pattern.permute.xlu0 0
    %333 = vperm.xlu0 %332, %v306
    %v334 = vpop.permute.xlu0 %333
    %335 = vset.pattern.permute.xlu0 0
    %336 = vperm.xlu0 %335, %v308
    %v337 = vpop.permute.xlu0 %336
    %338 = vset.pattern.permute.xlu0 0
    %339 = vperm.xlu0 %338, %v310
    %v340 = vpop.permute.xlu0 %339
    %341 = vset.pattern.permute.xlu0 0
    %342 = vperm.xlu0 %341, %v312
    %v343 = vpop.permute.xlu0 %342
    %344 = vset.pattern.permute.xlu0 0
    %345 = vperm.xlu0 %344, %v314
    %v346 = vpop.permute.xlu0 %345
    %347 = vset.pattern.permute.xlu0 0
    %348 = vperm.xlu0 %347, %v316
    %v349 = vpop.permute.xlu0 %348
    %350 = vset.pattern.permute.xlu0 0
    %351 = vperm.xlu0 %350, %v318
    %v352 = vpop.permute.xlu0 %351
    %v353 = vlaneseq
    %v354 = vshrl.u32 %v353, 7
    %v355 = vsub.s32 %v195, %v354
    %v356 = vrot.slane %v331, %v355
    %v357 = vlaneseq
    %v358 = vshrl.u32 %v357, 7
    %v359 = vsub.s32 %v195, %v358
    %v360 = vrot.slane %v334, %v359
    %v361 = vlaneseq
    %v362 = vshrl.u32 %v361, 7
    %v363 = vsub.s32 %v195, %v362
    %v364 = vrot.slane %v337, %v363
    %v365 = vlaneseq
    %v366 = vshrl.u32 %v365, 7
    %v367 = vsub.s32 %v195, %v366
    %v368 = vrot.slane %v340, %v367
    %v369 = vlaneseq
    %v370 = vshrl.u32 %v369, 7
    %v371 = vsub.s32 %v195, %v370
    %v372 = vrot.slane %v343, %v371
    %v373 = vlaneseq
    %v374 = vshrl.u32 %v373, 7
    %v375 = vsub.s32 %v195, %v374
    %v376 = vrot.slane %v346, %v375
    %v377 = vlaneseq
    %v378 = vshrl.u32 %v377, 7
    %v379 = vsub.s32 %v195, %v378
    %v380 = vrot.slane %v349, %v379
    %v381 = vlaneseq
    %v382 = vshrl.u32 %v381, 7
    %v383 = vsub.s32 %v195, %v382
    %v384 = vrot.slane %v352, %v383
    %v385 = vsel %vm228, %v360, %v356
    %v386 = vsel %vm230, %v364, %v385
    %v387 = vsel %vm232, %v368, %v386
    %v388 = vsel %vm234, %v372, %v387
    %v389 = vsel %vm236, %v376, %v388
    %v390 = vsel %vm238, %v380, %v389
    %v391 = vsel %vm240, %v384, %v390
    %v393 = vsel %vm243, %v391, 0.0
    %394 = vadd.xlane.f32.xlu0 %v393
    %v395 = vpop.xlane.xlu0 %394
    %v396 = vadd.f32 %v320, %v395
    %v405 = vmul.f32 %v331, %v96
    %v406 = vmul.f32 %v334, %v97
    %v407 = vmul.f32 %v337, %v98
    %v408 = vmul.f32 %v340, %v99
    %v409 = vmul.f32 %v343, %v100
    %v410 = vmul.f32 %v346, %v101
    %v411 = vmul.f32 %v349, %v102
    %v412 = vmul.f32 %v352, %v103
    %v413 = vsel %vm160, %v405, 0.0
    %v414 = vrot.slane %v413, 4
    %v415 = vadd.f32 %v413, %v414
    %v416 = vrot.slane %v415, 2
    %v417 = vadd.f32 %v415, %v416
    %v418 = vrot.slane %v417, 1
    %v419 = vadd.f32 %v417, %v418
    %v420 = vsel %vm160, %v406, 0.0
    %v421 = vrot.slane %v420, 4
    %v422 = vadd.f32 %v420, %v421
    %v423 = vrot.slane %v422, 2
    %v424 = vadd.f32 %v422, %v423
    %v425 = vrot.slane %v424, 1
    %v426 = vadd.f32 %v424, %v425
    %v427 = vsel %vm160, %v407, 0.0
    %v428 = vrot.slane %v427, 4
    %v429 = vadd.f32 %v427, %v428
    %v430 = vrot.slane %v429, 2
    %v431 = vadd.f32 %v429, %v430
    %v432 = vrot.slane %v431, 1
    %v433 = vadd.f32 %v431, %v432
    %v434 = vsel %vm160, %v408, 0.0
    %v435 = vrot.slane %v434, 4
    %v436 = vadd.f32 %v434, %v435
    %v437 = vrot.slane %v436, 2
    %v438 = vadd.f32 %v436, %v437
    %v439 = vrot.slane %v438, 1
    %v440 = vadd.f32 %v438, %v439
    %v441 = vsel %vm160, %v409, 0.0
    %v442 = vrot.slane %v441, 4
    %v443 = vadd.f32 %v441, %v442
    %v444 = vrot.slane %v443, 2
    %v445 = vadd.f32 %v443, %v444
    %v446 = vrot.slane %v445, 1
    %v447 = vadd.f32 %v445, %v446
    %v448 = vsel %vm160, %v410, 0.0
    %v449 = vrot.slane %v448, 4
    %v450 = vadd.f32 %v448, %v449
    %v451 = vrot.slane %v450, 2
    %v452 = vadd.f32 %v450, %v451
    %v453 = vrot.slane %v452, 1
    %v454 = vadd.f32 %v452, %v453
    %v455 = vsel %vm160, %v411, 0.0
    %v456 = vrot.slane %v455, 4
    %v457 = vadd.f32 %v455, %v456
    %v458 = vrot.slane %v457, 2
    %v459 = vadd.f32 %v457, %v458
    %v460 = vrot.slane %v459, 1
    %v461 = vadd.f32 %v459, %v460
    %v462 = vsel %vm160, %v412, 0.0
    %v463 = vrot.slane %v462, 4
    %v464 = vadd.f32 %v462, %v463
    %v465 = vrot.slane %v464, 2
    %v466 = vadd.f32 %v464, %v465
    %v467 = vrot.slane %v466, 1
    %v468 = vadd.f32 %v466, %v467
    %v469 = vld [vmem:[#allocation4] sm:$0xff]
    %471 = vset.pattern.permute.xlu0 0
    %472 = vperm.xlu0 %471, %v250
    %v473 = vpop.permute.xlu0 %472
    %v475 = vmul.f32 %v473, %v469
    %v484 = vsel %vm228, %v426, %v419
    %v485 = vsel %vm230, %v433, %v484
    %v486 = vsel %vm232, %v440, %v485
    %v487 = vsel %vm234, %v447, %v486
    %v488 = vsel %vm236, %v454, %v487
    %v489 = vsel %vm238, %v461, %v488
    %v490 = vsel %vm240, %v468, %v489
    %v492 = vadd.f32 %v475, %v490
    %vm493 = vcmask 7168
    %494 = vst.msk [vmem:[#allocation2] sm:$0xff] %vm493, %v247
    %495 = vst.msk [vmem:[#allocation3] sm:$0xff] %vm493, %v396
    %496 = vst.msk [vmem:[#allocation4] sm:$0xff] %vm160, %v492
    // Predicated region
    $region42: #{tpu_custom_call.1} parent=1 // pred_check
      %p497 = pneg %p79
    $region43: #{tpu_custom_call.1} parent=1 // pred_check_branch
      %499 = sbr.rel (%p497) target = $region45
    $region44: #{tpu_custom_call.1} parent=1 // pred_region
      %v500 = vrcp.pop %v396
      %502 = vset.pattern.permute.xlu0 0
      %503 = vperm.xlu0 %502, %v500
      %v504 = vpop.permute.xlu0 %503
      %v506 = vmul.f32 %v492, %v504
      %v507 = vld [vmem:[#allocation10] sm:$0xff]
      %v508 = vld [vmem:[#allocation10 + $0x8] sm:$0xff]
      %v509 = vld [vmem:[#allocation10 + $0x10] sm:$0xff]
      %v510 = vld [vmem:[#allocation10 + $0x18] sm:$0xff]
      %v511 = vld [vmem:[#allocation11] sm:$0xff]
      %v512 = vld [vmem:[#allocation11 + $0x8] sm:$0xff]
      %v513 = vld [vmem:[#allocation11 + $0x10] sm:$0xff]
      %v514 = vld [vmem:[#allocation11 + $0x18] sm:$0xff]
      %v515 = vcombine.low %v88, %v89
      %v516 = vcombine.low %v90, %v91
      %v517 = vcombine.low %v92, %v93
      %v518 = vcombine.low %v94, %v95
      %v520 = vunpack.c.l.s4 1966171168
      %v521 = vunpack.c.0.s8 %v520
      %v522 = vlaneseq
      %v523 = vshrl.u32 %v522, 7
      %v524 = vsub.s32 %v521, %v523
      %v525 = vrot.slane %v515, %v524
      %v527 = vunpack.c.l.s4 1966171168
      %v528 = vunpack.c.0.s8 %v527
      %v529 = vlaneseq
      %v530 = vshrl.u32 %v529, 7
      %v531 = vsub.s32 %v528, %v530
      %v532 = vrot.slane %v516, %v531
      %v534 = vunpack.c.l.s4 1966171168
      %v535 = vunpack.c.0.s8 %v534
      %v536 = vlaneseq
      %v537 = vshrl.u32 %v536, 7
      %v538 = vsub.s32 %v535, %v537
      %v539 = vrot.slane %v517, %v538
      %v541 = vunpack.c.l.s4 1966171168
      %v542 = vunpack.c.0.s8 %v541
      %v543 = vlaneseq
      %v544 = vshrl.u32 %v543, 7
      %v545 = vsub.s32 %v542, %v544
      %v546 = vrot.slane %v518, %v545
      %v547 = vcombine.low %v525, %v532
      %v548 = vcombine.low %v539, %v546
      %v550 = vunpack.c.l.s4 1966171168
      %v551 = vunpack.c.0.s8 %v550
      %v552 = vlaneseq
      %v553 = vshrl.u32 %v552, 7
      %v554 = vsub.s32 %v551, %v553
      %v555 = vrot.slane %v547, %v554
      %v557 = vunpack.c.l.s4 1966171168
      %v558 = vunpack.c.0.s8 %v557
      %v559 = vlaneseq
      %v560 = vshrl.u32 %v559, 7
      %v561 = vsub.s32 %v558, %v560
      %v562 = vrot.slane %v548, %v561
      %v563 = vcombine.low %v555, %v562
      %v564 = vsel %vm160, %v563, 0
      %566 = vmatprep.subr.mxu0 0.0
      %567 = vmatpush1.msra.mxu0 %v511
      %568 = vmatprep.subr.mxu0 0.0
      %569 = vmatpush1.msra.mxu0 %v512
      %570 = vmatprep.subr.mxu0 0.0
      %571 = vmatpush1.msra.mxu0 %v513
      %572 = vmatprep.subr.mxu0 0.0
      %573 = vmatpush1.msra.mxu0 %v514
      %574 = vmatprep.subr.mxu0 0.0
      %575 = vmatpush1.msra.mxu0 0.0
      %576 = vmatprep.subr.mxu0 0.0
      %577 = vmatpush1.msra.mxu0 0.0
      %578 = vmatprep.subr.mxu0 0.0
      %579 = vmatpush1.msra.mxu0 0.0
      %580 = vmatprep.subr.mxu0 0.0
      %581 = vmatpush1.msra.mxu0 0.0
      %582 = vmatprep.subr.mxu0 0.0
      %583 = vmatpush1.msra.mxu0 0.0
      %584 = vmatprep.subr.mxu0 0.0
      %585 = vmatpush1.msra.mxu0 0.0
      %586 = vmatprep.subr.mxu0 0.0
      %587 = vmatpush1.msra.mxu0 0.0
      %588 = vmatprep.subr.mxu0 0.0
      %589 = vmatpush1.msra.mxu0 0.0
      %590 = vmatprep.subr.mxu0 0.0
      %591 = vmatpush1.msra.mxu0 0.0
      %592 = vmatprep.subr.mxu0 0.0
      %593 = vmatpush1.msra.mxu0 0.0
      %594 = vmatprep.subr.mxu0 0.0
      %595 = vmatpush1.msra.mxu0 0.0
      %596 = vmatprep.subr.mxu0 0.0
      %597 = vmatpush1.msra.mxu0 0.0
      %598 = vmatprep.subr.mxu0 0.0
      %599 = vmatpush1.msra.mxu0 0.0
      %600 = vmatprep.subr.mxu0 0.0
      %601 = vmatpush1.msra.mxu0 0.0
      %602 = vmatprep.subr.mxu0 0.0
      %603 = vmatpush1.msra.mxu0 0.0
      %604 = vmatprep.subr.mxu0 0.0
      %605 = vmatpush1.msra.mxu0 0.0
      %606 = vmatprep.subr.mxu0 0.0
      %607 = vmatpush1.msra.mxu0 0.0
      %608 = vmatprep.subr.mxu0 0.0
      %609 = vmatpush1.msra.mxu0 0.0
      %610 = vmatprep.subr.mxu0 0.0
      %611 = vmatpush1.msra.mxu0 0.0
      %612 = vmatprep.subr.mxu0 0.0
      %613 = vmatpush1.msra.mxu0 0.0
      %614 = vmatprep.subr.mxu0 0.0
      %615 = vmatpush1.msra.mxu0 0.0
      %616 = vmatprep.subr.mxu0 0.0
      %617 = vmatpush1.msra.mxu0 0.0
      %618 = vmatprep.subr.mxu0 0.0
      %619 = vmatpush1.msra.mxu0 0.0
      %620 = vmatprep.subr.mxu0 0.0
      %621 = vmatpush1.msra.mxu0 0.0
      %622 = vmatprep.subr.mxu0 0.0
      %623 = vmatpush1.msra.mxu0 0.0
      %624 = vmatprep.subr.mxu0 0.0
      %625 = vmatpush1.msra.mxu0 0.0
      %626 = vmatprep.subr.mxu0 0.0
      %627 = vmatpush1.msra.mxu0 0.0
      %628 = vmatprep.subr.mxu0 0.0
      %629 = vmatpush1.msra.mxu0 0.0
      %630 = vmatprep.mubr.f32.mxu0 0.0
      %631 = vmatmul.mubr.f32.gmra.mrb[0].mxu0 %v564
      %v632 = vpop.f32.mrb[0].mxu0
      %v633 = vadd.f32 0.0, %v632
      %v634 = vpop.f32.mrb[0].mxu0
      %635 = vdwg.mxu0
      %v637 = vsel %vm160, %v506, 0
      %639 = vmatprep.subr.mxu0 0.0
      %640 = vmatpush1.msra.mxu0 %v507
      %641 = vmatprep.subr.mxu0 0.0
      %642 = vmatpush1.msra.mxu0 %v508
      %643 = vmatprep.subr.mxu0 0.0
      %644 = vmatpush1.msra.mxu0 %v509
      %645 = vmatprep.subr.mxu0 0.0
      %646 = vmatpush1.msra.mxu0 %v510
      %647 = vmatprep.subr.mxu0 0.0
      %648 = vmatpush1.msra.mxu0 0.0
      %649 = vmatprep.subr.mxu0 0.0
      %650 = vmatpush1.msra.mxu0 0.0
      %651 = vmatprep.subr.mxu0 0.0
      %652 = vmatpush1.msra.mxu0 0.0
      %653 = vmatprep.subr.mxu0 0.0
      %654 = vmatpush1.msra.mxu0 0.0
      %655 = vmatprep.subr.mxu0 0.0
      %656 = vmatpush1.msra.mxu0 0.0
      %657 = vmatprep.subr.mxu0 0.0
      %658 = vmatpush1.msra.mxu0 0.0
      %659 = vmatprep.subr.mxu0 0.0
      %660 = vmatpush1.msra.mxu0 0.0
      %661 = vmatprep.subr.mxu0 0.0
      %662 = vmatpush1.msra.mxu0 0.0
      %663 = vmatprep.subr.mxu0 0.0
      %664 = vmatpush1.msra.mxu0 0.0
      %665 = vmatprep.subr.mxu0 0.0
      %666 = vmatpush1.msra.mxu0 0.0
      %667 = vmatprep.subr.mxu0 0.0
      %668 = vmatpush1.msra.mxu0 0.0
      %669 = vmatprep.subr.mxu0 0.0
      %670 = vmatpush1.msra.mxu0 0.0
      %671 = vmatprep.subr.mxu0 0.0
      %672 = vmatpush1.msra.mxu0 0.0
      %673 = vmatprep.subr.mxu0 0.0
      %674 = vmatpush1.msra.mxu0 0.0
      %675 = vmatprep.subr.mxu0 0.0
      %676 = vmatpush1.msra.mxu0 0.0
      %677 = vmatprep.subr.mxu0 0.0
      %678 = vmatpush1.msra.mxu0 0.0
      %679 = vmatprep.subr.mxu0 0.0
      %680 = vmatpush1.msra.mxu0 0.0
      %681 = vmatprep.subr.mxu0 0.0
      %682 = vmatpush1.msra.mxu0 0.0
      %683 = vmatprep.subr.mxu0 0.0
      %684 = vmatpush1.msra.mxu0 0.0
      %685 = vmatprep.subr.mxu0 0.0
      %686 = vmatpush1.msra.mxu0 0.0
      %687 = vmatprep.subr.mxu0 0.0
      %688 = vmatpush1.msra.mxu0 0.0
      %689 = vmatprep.subr.mxu0 0.0
      %690 = vmatpush1.msra.mxu0 0.0
      %691 = vmatprep.subr.mxu0 0.0
      %692 = vmatpush1.msra.mxu0 0.0
      %693 = vmatprep.subr.mxu0 0.0
      %694 = vmatpush1.msra.mxu0 0.0
      %695 = vmatprep.subr.mxu0 0.0
      %696 = vmatpush1.msra.mxu0 0.0
      %697 = vmatprep.subr.mxu0 0.0
      %698 = vmatpush1.msra.mxu0 0.0
      %699 = vmatprep.subr.mxu0 0.0
      %700 = vmatpush1.msra.mxu0 0.0
      %701 = vmatprep.subr.mxu0 0.0
      %702 = vmatpush1.msra.mxu0 0.0
      %703 = vmatprep.mubr.f32.mxu0 0.0
      %704 = vmatmul.mubr.f32.gmra.mrb[0].mxu0 %v637
      %v705 = vpop.f32.mrb[0].mxu0
      %v706 = vadd.f32 %v633, %v705
      %v707 = vpop.f32.mrb[0].mxu0
      %708 = vdwg.mxu0
      %v709 = vld [vmem:[%s4] sm:$0x1]
      %v711 = vlaneseq
      %v712 = vshrl.u32 %v711, 7
      %v713 = vsub.s32 0, %v712
      %v714 = vrot.slane %v709, %v713
      %v716 = vadd.f32 %v706, %v714
      %v717 = vtanh.pop %v716
      %v719 = vcombine.high %v717, %v717
      %v721 = vunpack.c.l.s4 1966171168
      %v722 = vunpack.c.0.s8 %v721
      %v723 = vlaneseq
      %v724 = vshrl.u32 %v723, 7
      %v725 = vsub.s32 %v722, %v724
      %v726 = vrot.slane %v717, %v725
      %v728 = vunpack.c.l.s4 1966171168
      %v729 = vunpack.c.0.s8 %v728
      %v730 = vlaneseq
      %v731 = vshrl.u32 %v730, 7
      %v732 = vsub.s32 %v729, %v731
      %v733 = vrot.slane %v719, %v732
      %v734 = vcombine.high %v726, %v726
      %v735 = vcombine.high %v733, %v733
      %v737 = vunpack.c.l.s4 1966171168
      %v738 = vunpack.c.0.s8 %v737
      %v739 = vlaneseq
      %v740 = vshrl.u32 %v739, 7
      %v741 = vsub.s32 %v738, %v740
      %v742 = vrot.slane %v726, %v741
      %v744 = vunpack.c.l.s4 1966171168
      %v745 = vunpack.c.0.s8 %v744
      %v746 = vlaneseq
      %v747 = vshrl.u32 %v746, 7
      %v748 = vsub.s32 %v745, %v747
      %v749 = vrot.slane %v733, %v748
      %v751 = vunpack.c.l.s4 1966171168
      %v752 = vunpack.c.0.s8 %v751
      %v753 = vlaneseq
      %v754 = vshrl.u32 %v753, 7
      %v755 = vsub.s32 %v752, %v754
      %v756 = vrot.slane %v734, %v755
      %v758 = vunpack.c.l.s4 1966171168
      %v759 = vunpack.c.0.s8 %v758
      %v760 = vlaneseq
      %v761 = vshrl.u32 %v760, 7
      %v762 = vsub.s32 %v759, %v761
      %v763 = vrot.slane %v735, %v762
      %v764 = vcombine.high %v742, %v742
      %v765 = vcombine.high %v749, %v749
      %v766 = vcombine.high %v756, %v756
      %v767 = vcombine.high %v763, %v763
      %vm776 = vcmask 253952
      %777 = vst.msk [vmem:[#allocation13] sm:$0x1] %vm776, %v742
      %778 = vst.msk [vmem:[#allocation13 + $0x1] sm:$0x1] %vm776, %v756
      %779 = vst.msk [vmem:[#allocation13 + $0x2] sm:$0x1] %vm776, %v764
      %780 = vst.msk [vmem:[#allocation13 + $0x3] sm:$0x1] %vm776, %v766
      %781 = vst.msk [vmem:[#allocation13 + $0x4] sm:$0x1] %vm776, %v749
      %782 = vst.msk [vmem:[#allocation13 + $0x5] sm:$0x1] %vm776, %v763
      %783 = vst.msk [vmem:[#allocation13 + $0x6] sm:$0x1] %vm776, %v765
      %784 = vst.msk [vmem:[#allocation13 + $0x7] sm:$0x1] %vm776, %v767
      %v785 = vlaneseq
      %v786 = vshrl.u32 %v785, 7
      %v787 = vsub.s32 0, %v786
      %v788 = vrot.slane %v504, %v787
      %v789 = vlaneseq
      %v790 = vshrl.u32 %v789, 7
      %v791 = vsub.s32 1, %v790
      %v792 = vrot.slane %v504, %v791
      %v793 = vlaneseq
      %v794 = vshrl.u32 %v793, 7
      %v795 = vsub.s32 2, %v794
      %v796 = vrot.slane %v504, %v795
      %v797 = vlaneseq
      %v798 = vshrl.u32 %v797, 7
      %v799 = vsub.s32 3, %v798
      %v800 = vrot.slane %v504, %v799
      %v801 = vlaneseq
      %v802 = vshrl.u32 %v801, 7
      %v803 = vsub.s32 4, %v802
      %v804 = vrot.slane %v504, %v803
      %v805 = vlaneseq
      %v806 = vshrl.u32 %v805, 7
      %v807 = vsub.s32 5, %v806
      %v808 = vrot.slane %v504, %v807
      %v809 = vlaneseq
      %v810 = vshrl.u32 %v809, 7
      %v811 = vsub.s32 6, %v810
      %v812 = vrot.slane %v504, %v811
      %v813 = vlaneseq
      %v814 = vshrl.u32 %v813, 7
      %v815 = vsub.s32 7, %v814
      %v816 = vrot.slane %v504, %v815
      %v825 = vmul.f32 %v304, %v788
      %v826 = vmul.f32 %v306, %v792
      %v827 = vmul.f32 %v308, %v796
      %v828 = vmul.f32 %v310, %v800
      %v829 = vmul.f32 %v312, %v804
      %v830 = vmul.f32 %v314, %v808
      %v831 = vmul.f32 %v316, %v812
      %v832 = vmul.f32 %v318, %v816
      %841 = vset.pattern.permute.xlu0 0
      %842 = vperm.xlu0 %841, %v825
      %v843 = vpop.permute.xlu0 %842
      %844 = vset.pattern.permute.xlu0 0
      %845 = vperm.xlu0 %844, %v826
      %v846 = vpop.permute.xlu0 %845
      %847 = vset.pattern.permute.xlu0 0
      %848 = vperm.xlu0 %847, %v827
      %v849 = vpop.permute.xlu0 %848
      %850 = vset.pattern.permute.xlu0 0
      %851 = vperm.xlu0 %850, %v828
      %v852 = vpop.permute.xlu0 %851
      %853 = vset.pattern.permute.xlu0 0
      %854 = vperm.xlu0 %853, %v829
      %v855 = vpop.permute.xlu0 %854
      %856 = vset.pattern.permute.xlu0 0
      %857 = vperm.xlu0 %856, %v830
      %v858 = vpop.permute.xlu0 %857
      %859 = vset.pattern.permute.xlu0 0
      %860 = vperm.xlu0 %859, %v831
      %v861 = vpop.permute.xlu0 %860
      %862 = vset.pattern.permute.xlu0 0
      %863 = vperm.xlu0 %862, %v832
      %v864 = vpop.permute.xlu0 %863
      %v865 = vlaneseq
      %v866 = vshrl.u32 %v865, 7
      %v867 = vsub.s32 %v195, %v866
      %v868 = vrot.slane %v843, %v867
      %v869 = vlaneseq
      %v870 = vshrl.u32 %v869, 7
      %v871 = vsub.s32 %v195, %v870
      %v872 = vrot.slane %v846, %v871
      %v873 = vlaneseq
      %v874 = vshrl.u32 %v873, 7
      %v875 = vsub.s32 %v195, %v874
      %v876 = vrot.slane %v849, %v875
      %v877 = vlaneseq
      %v878 = vshrl.u32 %v877, 7
      %v879 = vsub.s32 %v195, %v878
      %v880 = vrot.slane %v852, %v879
      %v881 = vlaneseq
      %v882 = vshrl.u32 %v881, 7
      %v883 = vsub.s32 %v195, %v882
      %v884 = vrot.slane %v855, %v883
      %v885 = vlaneseq
      %v886 = vshrl.u32 %v885, 7
      %v887 = vsub.s32 %v195, %v886
      %v888 = vrot.slane %v858, %v887
      %v889 = vlaneseq
      %v890 = vshrl.u32 %v889, 7
      %v891 = vsub.s32 %v195, %v890
      %v892 = vrot.slane %v861, %v891
      %v893 = vlaneseq
      %v894 = vshrl.u32 %v893, 7
      %v895 = vsub.s32 %v195, %v894
      %v896 = vrot.slane %v864, %v895
      %vm905 = vcmask 57344
      %906 = vst.msk [vmem:[#allocation14] sm:$0x1] %vm905, %v868
      %907 = vst.msk [vmem:[#allocation14 + $0x1] sm:$0x1] %vm905, %v872
      %908 = vst.msk [vmem:[#allocation14 + $0x2] sm:$0x1] %vm905, %v876
      %909 = vst.msk [vmem:[#allocation14 + $0x3] sm:$0x1] %vm905, %v880
      %910 = vst.msk [vmem:[#allocation14 + $0x4] sm:$0x1] %vm905, %v884
      %911 = vst.msk [vmem:[#allocation14 + $0x5] sm:$0x1] %vm905, %v888
      %912 = vst.msk [vmem:[#allocation14 + $0x6] sm:$0x1] %vm905, %v892
      %913 = vst.msk [vmem:[#allocation14 + $0x7] sm:$0x1] %vm905, %v896
    $region45: #{tpu_custom_call.1} parent=1 // pred_fallthru
      _
    // Predicated region
    $region46: #{tpu_custom_call.1} parent=1 // pred_check
      _
    $region47: #{tpu_custom_call.1} parent=1 // pred_check_branch
      %915 = sbr.rel (0) target = $region49
    $region48: #{tpu_custom_call.1} parent=1 // pred_region
      %s917 = ssub.s32 128, 128
      %918 = vsyncadd [#allocation7], %s917
      %s919 = sshll.u32 [#allocation13], 4
      %s920 = int_to_ptr.vmem [resolvable:$true] %s919
      %925 = dma.vmem_to_hbm [thread:$0]  %s920, 128, %s5, [#allocation7], 16, 16, 1
    $region49: #{tpu_custom_call.1} parent=1 // pred_fallthru
      _
    // Predicated region
    $region50: #{tpu_custom_call.1} parent=1 // pred_check
      _
    $region51: #{tpu_custom_call.1} parent=1 // pred_check_branch
      %927 = sbr.rel (0) target = $region53
    $region52: #{tpu_custom_call.1} parent=1 // pred_region
      %s929 = ssub.s32 128, 128
      %930 = vsyncadd [#allocation15], %s929
      %s931 = sshll.u32 [#allocation14], 4
      %s932 = int_to_ptr.vmem [resolvable:$true] %s931
      %937 = dma.vmem_to_hbm [thread:$0]  %s932, 128, %s6, [#allocation15], 16, 16, 1
    $region53: #{tpu_custom_call.1} parent=1 // pred_fallthru
      _
    // Predicated region
    $region54: #{tpu_custom_call.1} parent=1 // pred_check
      _
    $region55: #{tpu_custom_call.1} parent=1 // pred_check_branch
      %939 = sbr.rel (0) target = $region57
    $region56: #{tpu_custom_call.1} parent=1 // pred_region
      %940 = dma.done [#allocation7], 128
    $region57: #{tpu_custom_call.1} parent=1 // pred_fallthru
      _
    // Predicated region
    $region58: #{tpu_custom_call.1} parent=1 // pred_check
      _
    $region59: #{tpu_custom_call.1} parent=1 // pred_check_branch
      %942 = sbr.rel (0) target = $region61
    $region60: #{tpu_custom_call.1} parent=1 // pred_region
      %943 = dma.done [#allocation15], 128
    $region61: #{tpu_custom_call.1} parent=1 // pred_fallthru
      _
    %944 = vsyncpa [#allocation6], 1
    %945 = vsyncpa [#allocation9], 1
    %946 = vsyncpa [#allocation12], 1
    %947 = vsyncpa [#allocation7], 1
    %948 = vsyncpa [#allocation15], 1

</llo_original>
